<compile_context>
chip_gen: v7x
topology: tpu7x:2x2x1
jax: 0.10.0
libtpu: 0.0.40
codegen_flags: <defaults>
</compile_context>

<pallas_src>
import functools

import jax
import jax.numpy as jnp
from jax import lax
from jax.experimental import pallas as pl
from jax.experimental.pallas import tpu as pltpu


def _dsep_kernel(x_ref, dwt_ref, pwb_ref, b1_ref, b2_ref, out_ref,
                 *, H, W, C, K, nl):
    """One grid step = TB images in lane-dense (TB*H, W*C) layout.

    x_ref:   (TB*H, W*C) f32   input block (also the residual source)
    dwt_ref: (K*K, W*C)  f32   depthwise weights, tap-major (t = kh*K + kw),
                               BN1 scale folded, tiled along W, W-halo lanes
                               already zeroed in the wrapper.
    pwb_ref: (W*C, W*C)  bf16  block-diagonal pointwise weights kron(I_W, pw*s2)
    b1_ref:  (1, W*C)    f32   BN1 shift (tiled along W)
    b2_ref:  (1, W*C)    f32   BN2 shift (tiled along W)
    out_ref: (TB*H, W*C)
    """
    R, WC = x_ref.shape
    pad = (K - 1) // 2

    x = x_ref[...].astype(jnp.float32)                         # (R, WC)

    # Per-image row-validity masks for the H halo (built once, reused by all
    # kw taps).  Rows of adjacent images in the block never leak into each
    # other's halo because validity is computed on the row id *within* image.
    hvalid = {}
    if pad:
        hi = lax.broadcasted_iota(jnp.int32, (R, WC), 0) % H
        for dh in range(-pad, pad + 1):
            if dh != 0:
                hvalid[dh] = (hi + dh >= 0) & (hi + dh < H)

    # Accumulator starts at the BN1 shift (folds the post-conv add away).
    acc = jnp.broadcast_to(b1_ref[0][None, :], (R, WC)).astype(jnp.float32)

    # Depthwise KxK conv: XLU rolls instead of concatenated halos /
    # misaligned lane slices.  W-boundary handled by zeros baked into dwt.
    for kh in range(K):
        dh = kh - pad
        if dh == 0:
            rowx = x
        else:
            rowx = pltpu.roll(x, shift=(-dh) % R, axis=0)       # sublane roll
            rowx = jnp.where(hvalid[dh], rowx, 0.0)
        for kw in range(K):
            dw = kw - pad
            if dw == 0:
                y = rowx
            else:
                y = pltpu.roll(rowx, shift=(-dw * C) % WC, axis=1)  # lane roll
            acc = acc + y * dwt_ref[kh * K + kw, :][None, :]

    # Nonlinearity (BN1 shift already included in acc).
    if nl == 'RE':
        h = jnp.maximum(acc, 0.0)
    else:                                    # 'HS': x * relu6(x + 3) / 6
        h = acc * jnp.clip(acc + 3.0, 0.0, 6.0) * (1.0 / 6.0)

    # Pointwise 1x1 conv as ONE lane-dense block-diagonal MXU matmul
    # (bf16 operands, f32 accumulation; BN2 scale folded into the columns).
    h2 = jnp.dot(h.astype(pwb_ref.dtype), pwb_ref[...],
                 preferred_element_type=jnp.float32)
    h2 = h2 + b2_ref[0][None, :]

    # Residual: re-read the VMEM-resident input right before the add so the
    # f32 copy of x is not kept live across the tap loop / matmul.
    out_ref[...] = (x_ref[...].astype(jnp.float32) + h2).astype(out_ref.dtype)


def _fold_bn(gamma, beta, mean, var, eps):
    s = gamma / jnp.sqrt(var + eps)
    return s, beta - mean * s


def _pick_batch_tile(N, H, WC, itemsize, target_bytes=1 << 20):
    """Largest batch tile with block <= target_bytes, (TB*H) % 8 == 0, and
    (when N allows it) >= 2 grid steps so v7x's 2 TensorCores both get work."""
    image_bytes = H * WC * itemsize
    divs = [d for d in range(1, N + 1)
            if N % d == 0 and (d * H) % 8 == 0
            and d * image_bytes <= target_bytes]
    if not divs:
        return 1 if H % 8 == 0 else N
    pref = [d for d in divs if N // d >= 2]
    return max(pref) if pref else max(divs)


def depthwise_separable_block_lane_dense(
        x_flat, params, *, C, W, kernel=3, stride=1, nl='HS', eps=1e-5,
        batch_tile=None):
    """Pallas forward pass on lane-dense activations.

    x_flat: (N, H, W*C) — NHWC with W and C fused on the lane axis.  In a
    full MobileNetV3 this layout should be kept across consecutive blocks;
    NCHW conversion belongs at the model boundary only (see adapter below).
    """
    assert stride == 1, "residual add in the module implies stride == 1"
    N, H, WC = x_flat.shape
    assert WC == W * C
    K = kernel
    pad = (K - 1) // 2
    assert WC <= 2048, "use a channel-last pointwise path for large W*C"

    s1, b1 = _fold_bn(params['bn1_gamma'], params['bn1_beta'],
                      params['bn1_mean'], params['bn1_var'], eps)
    s2, b2 = _fold_bn(params['bn2_gamma'], params['bn2_beta'],
                      params['bn2_mean'], params['bn2_var'], eps)

    # Depthwise weights: (C,1,K,K) -> (K*K, C) tap-major, fold BN1 scale,
    # tile over W, then zero the lanes whose source column falls outside the
    # image for each kw tap (W-halo mask baked into the weights -> no
    # in-kernel lane mask needed).
    dw_kkc = (jnp.transpose(params['dw_weight'][:, 0], (1, 2, 0))
              .reshape(K * K, C) * s1[None, :])
    dwt = jnp.tile(dw_kkc, (1, W))                               # (K*K, W*C)
    w_of_lane = jnp.repeat(jnp.arange(W), C)                     # (W*C,)
    dw_off = (jnp.arange(K * K) % K) - pad                       # (K*K,)
    src_w = w_of_lane[None, :] + dw_off[:, None]                 # (K*K, W*C)
    dwt = jnp.where((src_w >= 0) & (src_w < W), dwt, 0.0).astype(jnp.float32)

    # Pointwise weights: (C,C,1,1) -> (C_in, C_out), fold BN2 scale, expand to
    # block-diagonal (W*C, W*C) so the matmul stays lane-dense.
    pw_t = jnp.transpose(params['pw_weight'][:, :, 0, 0]) * s2[None, :]
    pw_big = jnp.kron(jnp.eye(W, dtype=pw_t.dtype), pw_t).astype(jnp.bfloat16)

    b1t = jnp.tile(b1, W).reshape(1, WC).astype(jnp.float32)
    b2t = jnp.tile(b2, W).reshape(1, WC).astype(jnp.float32)

    # Batch tiling: MiB-scale blocks amortize per-grid-step overhead and make
    # the pointwise matmul's M-dim = TB*H (128 at the demo shape).
    TB = batch_tile if batch_tile is not None else _pick_batch_tile(
        N, H, WC, x_flat.dtype.itemsize)
    assert N % TB == 0 and (TB * H) % 8 == 0
    R = TB * H

    x2d = x_flat.reshape(N * H, WC)              # free collapse of leading dims

    kern = functools.partial(_dsep_kernel, H=H, W=W, C=C, K=K, nl=nl)
    out2d = pl.pallas_call(
        kern,
        out_shape=jax.ShapeDtypeStruct((N * H, WC), x_flat.dtype),
        grid=(N // TB,),
        in_specs=[
            pl.BlockSpec((R, WC), lambda n: (n, 0)),
            pl.BlockSpec((K * K, WC), lambda n: (0, 0)),
            pl.BlockSpec((WC, WC), lambda n: (0, 0)),
            pl.BlockSpec((1, WC), lambda n: (0, 0)),
            pl.BlockSpec((1, WC), lambda n: (0, 0)),
        ],
        out_specs=pl.BlockSpec((R, WC), lambda n: (n, 0)),
        input_output_aliases={0: 0},             # residual input reuses out buf
        compiler_params=pltpu.CompilerParams(
            dimension_semantics=("parallel",)),
    )(x2d, dwt, pw_big, b1t, b2t)

    return out2d.reshape(N, H, WC)


def depthwise_separable_block(x_nchw, params, *, kernel=3, stride=1, nl='HS',
                              eps=1e-5, batch_tile=None):
    """NCHW adapter (PyTorch convention) around the lane-dense kernel.

    In a full model the transposes below run once at the model boundary, not
    per block; this adapter exists so the demo can compare against the NCHW
    reference directly.
    """
    N, C, H, W = x_nchw.shape
    x_flat = jnp.transpose(x_nchw, (0, 2, 3, 1)).reshape(N, H, W * C)
    out_flat = depthwise_separable_block_lane_dense(
        x_flat, params, C=C, W=W, kernel=kernel, stride=stride, nl=nl,
        eps=eps, batch_tile=batch_tile)
    return jnp.transpose(out_flat.reshape(N, H, W, C), (0, 3, 1, 2))


def reference_forward(x_nchw, params, *, kernel=3, nl='HS', eps=1e-5):
    """Pure-JAX reference (mirrors the PyTorch forward, eval-mode BN, f32)."""
    C = x_nchw.shape[1]
    pad = (kernel - 1) // 2

    def bn(x, g, b, m, v):
        g, b, m, v = (t[None, :, None, None] for t in (g, b, m, v))
        return (x - m) / jnp.sqrt(v + eps) * g + b

    out = lax.conv_general_dilated(
        x_nchw, params['dw_weight'], window_strides=(1, 1),
        padding=((pad, pad), (pad, pad)),
        dimension_numbers=('NCHW', 'OIHW', 'NCHW'),
        feature_group_count=C)
    out = bn(out, params['bn1_gamma'], params['bn1_beta'],
             params['bn1_mean'], params['bn1_var'])
    if nl == 'RE':
        out = jnp.maximum(out, 0.0)
    else:
        out = out * jnp.clip(out + 3.0, 0.0, 6.0) / 6.0
    out = lax.conv_general_dilated(
        out, params['pw_weight'], window_strides=(1, 1), padding='VALID',
        dimension_numbers=('NCHW', 'OIHW', 'NCHW'))
    out = bn(out, params['bn2_gamma'], params['bn2_beta'],
             params['bn2_mean'], params['bn2_var'])
    return x_nchw + out


def make_params(key, C, K):
    ks = jax.random.split(key, 10)
    return {
        'dw_weight': 0.2 * jax.random.normal(ks[0], (C, 1, K, K), jnp.float32),
        'pw_weight': 0.2 * jax.random.normal(ks[1], (C, C, 1, 1), jnp.float32),
        'bn1_gamma': 1.0 + 0.1 * jax.random.normal(ks[2], (C,), jnp.float32),
        'bn1_beta': 0.1 * jax.random.normal(ks[3], (C,), jnp.float32),
        'bn1_mean': 0.1 * jax.random.normal(ks[4], (C,), jnp.float32),
        'bn1_var': jax.random.uniform(ks[5], (C,), jnp.float32, 0.5, 1.5),
        'bn2_gamma': 1.0 + 0.1 * jax.random.normal(ks[6], (C,), jnp.float32),
        'bn2_beta': 0.1 * jax.random.normal(ks[7], (C,), jnp.float32),
        'bn2_mean': 0.1 * jax.random.normal(ks[8], (C,), jnp.float32),
        'bn2_var': jax.random.uniform(ks[9], (C,), jnp.float32, 0.5, 1.5),
    }


if __name__ == "__main__":
    key = jax.random.PRNGKey(0)
    k_x, k_p = jax.random.split(key)

    # MobileNetV3's DepthwiseSeparableBlock uses kernel=3, stride=1, inp==oup.
    # Small demo shape: N=16, C=8, H=W=16 -> lane width W*C = 128, auto batch
    # tile TB=8 -> 2 grid steps, pointwise matmul M = TB*H = 128.
    N, C, H, W, K = 16, 8, 16, 16, 3
    x = jax.random.normal(k_x, (N, C, H, W), jnp.float32)   # NCHW like PyTorch
    params = make_params(k_p, C, K)

    for nl in ('RE', 'HS'):     # 'RE' is the config actually used in the model
        fwd = jax.jit(functools.partial(depthwise_separable_block,
                                        kernel=K, stride=1, nl=nl))
        out = jax.block_until_ready(fwd(x, params))
        ref = jax.block_until_ready(
            reference_forward(x, params, kernel=K, nl=nl))
        assert out.shape == x.shape and out.dtype == x.dtype
        # bf16 MXU operands on the pointwise conv -> relaxed tolerance vs f32.
        assert jnp.allclose(out, ref, atol=4e-2, rtol=4e-2), \
            f"nl={nl}: max abs err = {jnp.max(jnp.abs(out - ref))}"

    print("KERNEL_OK")
</pallas_src>

<mosaic_0001>
module attributes {stable_mosaic.version = 11 : i64} {
  func.func @_dsep_kernel(%arg0: i32, %arg1: memref<128x128xf32, #tpu.memory_space<vmem>>, %arg2: memref<9x128xf32, #tpu.memory_space<vmem>>, %arg3: memref<128x128xbf16, #tpu.memory_space<vmem>>, %arg4: memref<1x128xf32, #tpu.memory_space<vmem>>, %arg5: memref<1x128xf32, #tpu.memory_space<vmem>>, %arg6: memref<128x128xf32, #tpu.memory_space<vmem>>) attributes {dimension_semantics = [#tpu.dimension_semantics<parallel>], iteration_bounds = array<i64: 2>, scalar_prefetch = 0 : i64, scratch_operands = 0 : i64, tpu.core_type = #tpu.core_type<tc>, window_params = [{transform_indices = @transform_0, window_bounds = array<i64: 128, 128>}, {pipeline_mode = #tpu.pipeline_mode<synchronous>, transform_indices = @transform_1, window_bounds = array<i64: 9, 128>}, {pipeline_mode = #tpu.pipeline_mode<synchronous>, transform_indices = @transform_2, window_bounds = array<i64: 128, 128>}, {pipeline_mode = #tpu.pipeline_mode<synchronous>, transform_indices = @transform_3, window_bounds = array<i64: 1, 128>}, {pipeline_mode = #tpu.pipeline_mode<synchronous>, transform_indices = @transform_4, window_bounds = array<i64: 1, 128>}, {transform_indices = @transform_5, window_bounds = array<i64: 128, 128>}]} {
    %c0 = arith.constant 0 : index
    %c0_0 = arith.constant 0 : index
    %0 = vector.load %arg1[%c0, %c0_0] : memref<128x128xf32, #tpu.memory_space<vmem>>, vector<128x128xf32>
    %1 = tpu.iota {dimensions = array<i32: 0>} : vector<128x128xi32>
    %c16_i32 = arith.constant 16 : i32
    %c0_i32 = arith.constant 0 : i32
    %2 = arith.cmpi eq, %c16_i32, %c0_i32 : i32
    %c1_i32 = arith.constant 1 : i32
    %3 = arith.select %2, %c1_i32, %c16_i32 : i32
    %4 = vector.broadcast %3 : i32 to vector<128x128xi32>
    %5 = arith.remsi %1, %4 : vector<128x128xi32>
    %c0_i32_1 = arith.constant 0 : i32
    %6 = vector.broadcast %c0_i32_1 : i32 to vector<128x128xi32>
    %7 = arith.cmpi ne, %5, %6 : vector<128x128xi32>
    %c0_i32_2 = arith.constant 0 : i32
    %8 = vector.broadcast %c0_i32_2 : i32 to vector<128x128xi32>
    %9 = arith.cmpi slt, %5, %8 : vector<128x128xi32>
    %c0_i32_3 = arith.constant 0 : i32
    %10 = arith.cmpi slt, %3, %c0_i32_3 : i32
    %11 = vector.broadcast %10 : i1 to vector<128x128xi1>
    %12 = vector.broadcast %11 : vector<128x128xi1> to vector<128x128xi1>
    %13 = arith.xori %9, %12 : vector<128x128xi1>
    %14 = arith.andi %13, %7 : vector<128x128xi1>
    %15 = vector.broadcast %3 : i32 to vector<128x128xi32>
    %16 = arith.addi %5, %15 : vector<128x128xi32>
    %17 = arith.select %14, %16, %5 : vector<128x128xi1>, vector<128x128xi32>
    %c-1_i32 = arith.constant -1 : i32
    %18 = vector.broadcast %c-1_i32 : i32 to vector<128x128xi32>
    %19 = arith.addi %17, %18 : vector<128x128xi32>
    %c0_i32_4 = arith.constant 0 : i32
    %20 = vector.broadcast %c0_i32_4 : i32 to vector<128x128xi32>
    %21 = arith.cmpi sge, %19, %20 : vector<128x128xi32>
    %c-1_i32_5 = arith.constant -1 : i32
    %22 = vector.broadcast %c-1_i32_5 : i32 to vector<128x128xi32>
    %23 = arith.addi %17, %22 : vector<128x128xi32>
    %c16_i32_6 = arith.constant 16 : i32
    %24 = vector.broadcast %c16_i32_6 : i32 to vector<128x128xi32>
    %25 = arith.cmpi slt, %23, %24 : vector<128x128xi32>
    %26 = arith.andi %21, %25 : vector<128x128xi1>
    %c1_i32_7 = arith.constant 1 : i32
    %27 = vector.broadcast %c1_i32_7 : i32 to vector<128x128xi32>
    %28 = arith.addi %17, %27 : vector<128x128xi32>
    %c0_i32_8 = arith.constant 0 : i32
    %29 = vector.broadcast %c0_i32_8 : i32 to vector<128x128xi32>
    %30 = arith.cmpi sge, %28, %29 : vector<128x128xi32>
    %c1_i32_9 = arith.constant 1 : i32
    %31 = vector.broadcast %c1_i32_9 : i32 to vector<128x128xi32>
    %32 = arith.addi %17, %31 : vector<128x128xi32>
    %c16_i32_10 = arith.constant 16 : i32
    %33 = vector.broadcast %c16_i32_10 : i32 to vector<128x128xi32>
    %34 = arith.cmpi slt, %32, %33 : vector<128x128xi32>
    %35 = arith.andi %30, %34 : vector<128x128xi1>
    %c0_11 = arith.constant 0 : index
    %c0_12 = arith.constant 0 : index
    %36 = vector.load %arg4[%c0_11, %c0_12] : memref<1x128xf32, #tpu.memory_space<vmem>>, vector<1x128xf32>
    %37 = vector.shape_cast %36 : vector<1x128xf32> to vector<128xf32>
    %38 = vector.shape_cast %37 : vector<128xf32> to vector<1x128xf32>
    %39 = vector.shape_cast %38 : vector<1x128xf32> to vector<1x128xf32>
    %40 = vector.broadcast %39 : vector<1x128xf32> to vector<128x128xf32>
    %c1_i32_13 = arith.constant 1 : i32
    %41 = tpu.dynamic_rotate %0 by %c1_i32_13 dim 0 : vector<128x128xf32>, i32 -> vector<128x128xf32>
    %cst = arith.constant 0.000000e+00 : f32
    %42 = vector.broadcast %cst : f32 to vector<128x128xf32>
    %43 = arith.select %26, %41, %42 : vector<128x128xi1>, vector<128x128xf32>
    %c8_i32 = arith.constant 8 : i32
    %44 = tpu.dynamic_rotate %43 by %c8_i32 dim 1 : vector<128x128xf32>, i32 -> vector<128x128xf32>
    %c0_14 = arith.constant 0 : index
    %c0_15 = arith.constant 0 : index
    %45 = vector.load %arg2[%c0_14, %c0_15] : memref<9x128xf32, #tpu.memory_space<vmem>>, vector<1x128xf32>
    %46 = vector.shape_cast %45 : vector<1x128xf32> to vector<128xf32>
    %47 = vector.shape_cast %46 : vector<128xf32> to vector<1x128xf32>
    %48 = vector.broadcast %47 : vector<1x128xf32> to vector<128x128xf32>
    %49 = arith.mulf %44, %48 : vector<128x128xf32>
    %50 = arith.addf %40, %49 : vector<128x128xf32>
    %c1 = arith.constant 1 : index
    %c0_16 = arith.constant 0 : index
    %51 = vector.load %arg2[%c1, %c0_16] : memref<9x128xf32, #tpu.memory_space<vmem>>, vector<1x128xf32>
    %52 = vector.shape_cast %51 : vector<1x128xf32> to vector<128xf32>
    %53 = vector.shape_cast %52 : vector<128xf32> to vector<1x128xf32>
    %54 = vector.broadcast %53 : vector<1x128xf32> to vector<128x128xf32>
    %55 = arith.mulf %43, %54 : vector<128x128xf32>
    %56 = arith.addf %50, %55 : vector<128x128xf32>
    %c120_i32 = arith.constant 120 : i32
    %57 = tpu.dynamic_rotate %43 by %c120_i32 dim 1 : vector<128x128xf32>, i32 -> vector<128x128xf32>
    %c2 = arith.constant 2 : index
    %c0_17 = arith.constant 0 : index
    %58 = vector.load %arg2[%c2, %c0_17] : memref<9x128xf32, #tpu.memory_space<vmem>>, vector<1x128xf32>
    %59 = vector.shape_cast %58 : vector<1x128xf32> to vector<128xf32>
    %60 = vector.shape_cast %59 : vector<128xf32> to vector<1x128xf32>
    %61 = vector.broadcast %60 : vector<1x128xf32> to vector<128x128xf32>
    %62 = arith.mulf %57, %61 : vector<128x128xf32>
    %63 = arith.addf %56, %62 : vector<128x128xf32>
    %c8_i32_18 = arith.constant 8 : i32
    %64 = tpu.dynamic_rotate %0 by %c8_i32_18 dim 1 : vector<128x128xf32>, i32 -> vector<128x128xf32>
    %c3 = arith.constant 3 : index
    %c0_19 = arith.constant 0 : index
    %65 = vector.load %arg2[%c3, %c0_19] : memref<9x128xf32, #tpu.memory_space<vmem>>, vector<1x128xf32>
    %66 = vector.shape_cast %65 : vector<1x128xf32> to vector<128xf32>
    %67 = vector.shape_cast %66 : vector<128xf32> to vector<1x128xf32>
    %68 = vector.broadcast %67 : vector<1x128xf32> to vector<128x128xf32>
    %69 = arith.mulf %64, %68 : vector<128x128xf32>
    %70 = arith.addf %63, %69 : vector<128x128xf32>
    %c4 = arith.constant 4 : index
    %c0_20 = arith.constant 0 : index
    %71 = vector.load %arg2[%c4, %c0_20] : memref<9x128xf32, #tpu.memory_space<vmem>>, vector<1x128xf32>
    %72 = vector.shape_cast %71 : vector<1x128xf32> to vector<128xf32>
    %73 = vector.shape_cast %72 : vector<128xf32> to vector<1x128xf32>
    %74 = vector.broadcast %73 : vector<1x128xf32> to vector<128x128xf32>
    %75 = arith.mulf %0, %74 : vector<128x128xf32>
    %76 = arith.addf %70, %75 : vector<128x128xf32>
    %c120_i32_21 = arith.constant 120 : i32
    %77 = tpu.dynamic_rotate %0 by %c120_i32_21 dim 1 : vector<128x128xf32>, i32 -> vector<128x128xf32>
    %c5 = arith.constant 5 : index
    %c0_22 = arith.constant 0 : index
    %78 = vector.load %arg2[%c5, %c0_22] : memref<9x128xf32, #tpu.memory_space<vmem>>, vector<1x128xf32>
    %79 = vector.shape_cast %78 : vector<1x128xf32> to vector<128xf32>
    %80 = vector.shape_cast %79 : vector<128xf32> to vector<1x128xf32>
    %81 = vector.broadcast %80 : vector<1x128xf32> to vector<128x128xf32>
    %82 = arith.mulf %77, %81 : vector<128x128xf32>
    %83 = arith.addf %76, %82 : vector<128x128xf32>
    %c127_i32 = arith.constant 127 : i32
    %84 = tpu.dynamic_rotate %0 by %c127_i32 dim 0 : vector<128x128xf32>, i32 -> vector<128x128xf32>
    %cst_23 = arith.constant 0.000000e+00 : f32
    %85 = vector.broadcast %cst_23 : f32 to vector<128x128xf32>
    %86 = arith.select %35, %84, %85 : vector<128x128xi1>, vector<128x128xf32>
    %c8_i32_24 = arith.constant 8 : i32
    %87 = tpu.dynamic_rotate %86 by %c8_i32_24 dim 1 : vector<128x128xf32>, i32 -> vector<128x128xf32>
    %c6 = arith.constant 6 : index
    %c0_25 = arith.constant 0 : index
    %88 = vector.load %arg2[%c6, %c0_25] : memref<9x128xf32, #tpu.memory_space<vmem>>, vector<1x128xf32>
    %89 = vector.shape_cast %88 : vector<1x128xf32> to vector<128xf32>
    %90 = vector.shape_cast %89 : vector<128xf32> to vector<1x128xf32>
    %91 = vector.broadcast %90 : vector<1x128xf32> to vector<128x128xf32>
    %92 = arith.mulf %87, %91 : vector<128x128xf32>
    %93 = arith.addf %83, %92 : vector<128x128xf32>
    %c7 = arith.constant 7 : index
    %c0_26 = arith.constant 0 : index
    %94 = vector.load %arg2[%c7, %c0_26] : memref<9x128xf32, #tpu.memory_space<vmem>>, vector<1x128xf32>
    %95 = vector.shape_cast %94 : vector<1x128xf32> to vector<128xf32>
    %96 = vector.shape_cast %95 : vector<128xf32> to vector<1x128xf32>
    %97 = vector.broadcast %96 : vector<1x128xf32> to vector<128x128xf32>
    %98 = arith.mulf %86, %97 : vector<128x128xf32>
    %99 = arith.addf %93, %98 : vector<128x128xf32>
    %c120_i32_27 = arith.constant 120 : i32
    %100 = tpu.dynamic_rotate %86 by %c120_i32_27 dim 1 : vector<128x128xf32>, i32 -> vector<128x128xf32>
    %c8 = arith.constant 8 : index
    %c0_28 = arith.constant 0 : index
    %101 = vector.load %arg2[%c8, %c0_28] : memref<9x128xf32, #tpu.memory_space<vmem>>, vector<1x128xf32>
    %102 = vector.shape_cast %101 : vector<1x128xf32> to vector<128xf32>
    %103 = vector.shape_cast %102 : vector<128xf32> to vector<1x128xf32>
    %104 = vector.broadcast %103 : vector<1x128xf32> to vector<128x128xf32>
    %105 = arith.mulf %100, %104 : vector<128x128xf32>
    %106 = arith.addf %99, %105 : vector<128x128xf32>
    %cst_29 = arith.constant 0.000000e+00 : f32
    %107 = vector.broadcast %cst_29 : f32 to vector<128x128xf32>
    %108 = arith.maximumf %106, %107 : vector<128x128xf32>
    %109 = arith.truncf %108 : vector<128x128xf32> to vector<128x128xbf16>
    %c0_30 = arith.constant 0 : index
    %c0_31 = arith.constant 0 : index
    %110 = vector.load %arg3[%c0_30, %c0_31] : memref<128x128xbf16, #tpu.memory_space<vmem>>, vector<128x128xbf16>
    %cst_32 = arith.constant dense<0.000000e+00> : vector<128x128xf32>
    %111 = tpu.matmul %109, %110, %cst_32 {dimension_numbers = #tpu.dot_dimension_numbers<[1], [0], [0], [1], [0, 0, 1, 1], [], []>} : vector<128x128xbf16>, vector<128x128xbf16>, vector<128x128xf32> -> vector<128x128xf32>
    %c0_33 = arith.constant 0 : index
    %c0_34 = arith.constant 0 : index
    %112 = vector.load %arg5[%c0_33, %c0_34] : memref<1x128xf32, #tpu.memory_space<vmem>>, vector<1x128xf32>
    %113 = vector.shape_cast %112 : vector<1x128xf32> to vector<128xf32>
    %114 = vector.shape_cast %113 : vector<128xf32> to vector<1x128xf32>
    %115 = vector.broadcast %114 : vector<1x128xf32> to vector<128x128xf32>
    %116 = arith.addf %111, %115 : vector<128x128xf32>
    %c0_35 = arith.constant 0 : index
    %c0_36 = arith.constant 0 : index
    %117 = vector.load %arg1[%c0_35, %c0_36] : memref<128x128xf32, #tpu.memory_space<vmem>>, vector<128x128xf32>
    %118 = arith.addf %117, %116 : vector<128x128xf32>
    %c0_37 = arith.constant 0 : index
    %c0_38 = arith.constant 0 : index
    %119 = vector.load %arg6[%c0_37, %c0_38] : memref<128x128xf32, #tpu.memory_space<vmem>>, vector<128x128xf32>
    tpu.vector_store %arg6[%c0_37, %c0_38], %118 {strides = array<i32>} : memref<128x128xf32, #tpu.memory_space<vmem>>, vector<128x128xf32>,
    return
  }
  func.func @transform_0(%arg0: i32) -> (i32, i32) {
    %c0_i32 = arith.constant 0 : i32
    %c0_i32_0 = arith.constant 0 : i32
    return %arg0, %c0_i32 : i32, i32
  }
  func.func @transform_1(%arg0: i32) -> (i32, i32) {
    %c0_i32 = arith.constant 0 : i32
    %c0_i32_0 = arith.constant 0 : i32
    %c0_i32_1 = arith.constant 0 : i32
    return %c0_i32, %c0_i32_0 : i32, i32
  }
  func.func @transform_2(%arg0: i32) -> (i32, i32) {
    %c0_i32 = arith.constant 0 : i32
    %c0_i32_0 = arith.constant 0 : i32
    %c0_i32_1 = arith.constant 0 : i32
    return %c0_i32, %c0_i32_0 : i32, i32
  }
  func.func @transform_3(%arg0: i32) -> (i32, i32) {
    %c0_i32 = arith.constant 0 : i32
    %c0_i32_0 = arith.constant 0 : i32
    %c0_i32_1 = arith.constant 0 : i32
    return %c0_i32, %c0_i32_0 : i32, i32
  }
  func.func @transform_4(%arg0: i32) -> (i32, i32) {
    %c0_i32 = arith.constant 0 : i32
    %c0_i32_0 = arith.constant 0 : i32
    %c0_i32_1 = arith.constant 0 : i32
    return %c0_i32, %c0_i32_0 : i32, i32
  }
  func.func @transform_5(%arg0: i32) -> (i32, i32) {
    %c0_i32 = arith.constant 0 : i32
    %c0_i32_0 = arith.constant 0 : i32
    return %arg0, %c0_i32 : i32, i32
  }
}

</mosaic_0001>

<llo_original>
// kernel: tile.28
$region0: #{tile.28}
  #allocation0 [shape = 's32[1]{0}', space=sflag, size = 0x4, scoped, tag = 'scoped memory for tile.28']
  %s0 = inlined_call_operand.vmem [shape: f32[8], index: 0, kind: input, shape index: {}]
  %s1 = inlined_call_operand.vmem [shape: f32[16,8], index: 1, kind: output, shape index: {}]
  // Predicated region
  $region2: #{tile.28} parent=0 // pred_check
    _
  $region3: #{tile.28} parent=0 // pred_check_branch
    %3 = sbr.rel (0) target = $region5
  $region4: #{tile.28} parent=0 // pred_region
    _
  $region5: #{tile.28} parent=0 // pred_fallthru
    _
  %v4 = vld [vmem:[%s0] ss:$0 sm:$0xff]
  %5 = vst [vmem:[%s1] sm:$0xff] %v4
  %s6 = scalar_lea.vmem %s1, 8
  %7 = vst [vmem:[%s6] sm:$0xff] %v4

// kernel: tile.29
$region0: #{tile.29}
  %s0 = inlined_call_operand.vmem [shape: f32[16,8], index: 0, kind: input, shape index: {}]
  %s1 = inlined_call_operand.vmem [shape: f32[1,128], index: 1, kind: output, shape index: {}]
  $region1: #{tile.29} parent=0
    #allocation0 [shape = 'u8[4096]{0}', space=vmem, size = 0x1000, scoped, tag = 'scoped mem for output reshape']
    %v2 = vld [vmem:[%s0] sm:$0x1]
    %vm3 = vcmask 64512
    %4 = vst.msk [vmem:[#allocation0] sm:$0x1] %vm3, %v2
    %s5 = scalar_lea.vmem %s0, 15
    %v6 = vld [vmem:[%s5] sm:$0x1]
    %7 = vrot.lane.b32.xlu0 %v6, 120
    %v8 = vpop.permute.xlu0 %7
    %vm9 = vcmask 1048512
    %10 = vst.msk [vmem:[#allocation0] sm:$0x1] %vm9, %v8
    %s11 = scalar_lea.vmem %s0, 14
    %v12 = vld [vmem:[%s11] sm:$0x1]
    %13 = vrot.lane.b32.xlu0 %v12, 112
    %v14 = vpop.permute.xlu0 %13
    %vm15 = vcmask 982912
    %16 = vst.msk [vmem:[#allocation0] sm:$0x1] %vm15, %v14
    %s17 = scalar_lea.vmem %s0, 13
    %v18 = vld [vmem:[%s17] sm:$0x1]
    %19 = vrot.lane.b32.xlu0 %v18, 104
    %v20 = vpop.permute.xlu0 %19
    %vm21 = vcmask 917312
    %22 = vst.msk [vmem:[#allocation0] sm:$0x1] %vm21, %v20
    %s23 = scalar_lea.vmem %s0, 12
    %v24 = vld [vmem:[%s23] sm:$0x1]
    %25 = vrot.lane.b32.xlu0 %v24, 96
    %v26 = vpop.permute.xlu0 %25
    %vm27 = vcmask 851712
    %28 = vst.msk [vmem:[#allocation0] sm:$0x1] %vm27, %v26
    %s29 = scalar_lea.vmem %s0, 11
    %v30 = vld [vmem:[%s29] sm:$0x1]
    %31 = vrot.lane.b32.xlu0 %v30, 88
    %v32 = vpop.permute.xlu0 %31
    %vm33 = vcmask 786112
    %34 = vst.msk [vmem:[#allocation0] sm:$0x1] %vm33, %v32
    %s35 = scalar_lea.vmem %s0, 10
    %v36 = vld [vmem:[%s35] sm:$0x1]
    %37 = vrot.lane.b32.xlu0 %v36, 80
    %v38 = vpop.permute.xlu0 %37
    %vm39 = vcmask 720512
    %40 = vst.msk [vmem:[#allocation0] sm:$0x1] %vm39, %v38
    %s41 = scalar_lea.vmem %s0, 9
    %v42 = vld [vmem:[%s41] sm:$0x1]
    %43 = vrot.lane.b32.xlu0 %v42, 72
    %v44 = vpop.permute.xlu0 %43
    %vm45 = vcmask 654912
    %46 = vst.msk [vmem:[#allocation0] sm:$0x1] %vm45, %v44
    %s47 = scalar_lea.vmem %s0, 8
    %v48 = vld [vmem:[%s47] sm:$0x1]
    %49 = vrot.lane.b32.xlu0 %v48, 64
    %v50 = vpop.permute.xlu0 %49
    %vm51 = vcmask 589312
    %52 = vst.msk [vmem:[#allocation0] sm:$0x1] %vm51, %v50
    %s53 = scalar_lea.vmem %s0, 7
    %v54 = vld [vmem:[%s53] sm:$0x1]
    %55 = vrot.lane.b32.xlu0 %v54, 56
    %v56 = vpop.permute.xlu0 %55
    %vm57 = vcmask 523712
    %58 = vst.msk [vmem:[#allocation0] sm:$0x1] %vm57, %v56
    %s59 = scalar_lea.vmem %s0, 6
    %v60 = vld [vmem:[%s59] sm:$0x1]
    %61 = vrot.lane.b32.xlu0 %v60, 48
    %v62 = vpop.permute.xlu0 %61
    %vm63 = vcmask 458112
    %64 = vst.msk [vmem:[#allocation0] sm:$0x1] %vm63, %v62
    %s65 = scalar_lea.vmem %s0, 5
    %v66 = vld [vmem:[%s65] sm:$0x1]
    %67 = vrot.lane.b32.xlu0 %v66, 40
    %v68 = vpop.permute.xlu0 %67
    %vm69 = vcmask 392512
    %70 = vst.msk [vmem:[#allocation0] sm:$0x1] %vm69, %v68
    %s71 = scalar_lea.vmem %s0, 4
    %v72 = vld [vmem:[%s71] sm:$0x1]
    %73 = vrot.lane.b32.xlu0 %v72, 32
    %v74 = vpop.permute.xlu0 %73
    %vm75 = vcmask 326912
    %76 = vst.msk [vmem:[#allocation0] sm:$0x1] %vm75, %v74
    %s77 = scalar_lea.vmem %s0, 3
    %v78 = vld [vmem:[%s77] sm:$0x1]
    %79 = vrot.lane.b32.xlu0 %v78, 24
    %v80 = vpop.permute.xlu0 %79
    %vm81 = vcmask 261312
    %82 = vst.msk [vmem:[#allocation0] sm:$0x1] %vm81, %v80
    %s83 = scalar_lea.vmem %s0, 2
    %v84 = vld [vmem:[%s83] sm:$0x1]
    %85 = vrot.lane.b32.xlu0 %v84, 16
    %v86 = vpop.permute.xlu0 %85
    %vm87 = vcmask 195712
    %88 = vst.msk [vmem:[#allocation0] sm:$0x1] %vm87, %v86
    %s89 = scalar_lea.vmem %s0, 1
    %v90 = vld [vmem:[%s89] sm:$0x1]
    %91 = vrot.lane.b32.xlu0 %v90, 8
    %v92 = vpop.permute.xlu0 %91
    %vm93 = vcmask 130112
    %94 = vst.msk [vmem:[#allocation0] sm:$0x1] %vm93, %v92
    %s96 = sshllo.u32 0, 1
    %v98 = vld [vmem:[#allocation0] sm:%s96]
    %s99 = sshllo.u32 0, 1
    %100 = vst [vmem:[%s1] sm:%s99] %v98

// kernel: tile.19
$region0: #{tile.19}
  %s0 = inlined_call_operand.vmem [shape: f32[9,16,8], index: 0, kind: input, shape index: {}]
  %s1 = inlined_call_operand.vmem [shape: f32[9,128], index: 1, kind: output, shape index: {}]
  %s2 = smov 3
  %v3 = vld [vmem:[%s0] ss:$16 sm:%s2]
  %s4 = smov 12
  %v5 = vld [vmem:[%s0] ss:$16 sm:%s4]
  %vm6 = vcmask 1043458
  %v7 = vsel %vm6, %v5, %v3
  %s8 = smov 48
  %v9 = vld [vmem:[%s0] ss:$16 sm:%s8]
  %vm10 = vcmask 1045508
  %v11 = vsel %vm10, %v9, %v7
  %s12 = smov 192
  %v13 = vld [vmem:[%s0] ss:$16 sm:%s12]
  %vm14 = vcmask 1047558
  %v15 = vsel %vm14, %v13, %v11
  %vm16 = vcmask 64512
  %17 = vst.msk [vmem:[%s1] sm:$0xff] %vm16, %v15
  %s18 = scalar_lea.vmem %s0, 128
  %v19 = vld [vmem:[%s18] sm:$0x1]
  %vm20 = vcmask 64512
  %s21 = scalar_lea.vmem %s1, 8
  %22 = vst.msk [vmem:[%s21] sm:$0x1] %vm20, %v19
  %s23 = scalar_lea.vmem %s0, 15
  %s24 = smov 3
  %v25 = vld [vmem:[%s23] ss:$16 sm:%s24]
  %s26 = scalar_lea.vmem %s0, 15
  %s27 = smov 12
  %v28 = vld [vmem:[%s26] ss:$16 sm:%s27]
  %vm29 = vcmask 1043458
  %v30 = vsel %vm29, %v28, %v25
  %s31 = scalar_lea.vmem %s0, 15
  %s32 = smov 48
  %v33 = vld [vmem:[%s31] ss:$16 sm:%s32]
  %vm34 = vcmask 1045508
  %v35 = vsel %vm34, %v33, %v30
  %s36 = scalar_lea.vmem %s0, 15
  %s37 = smov 192
  %v38 = vld [vmem:[%s36] ss:$16 sm:%s37]
  %vm39 = vcmask 1047558
  %v40 = vsel %vm39, %v38, %v35
  %41 = vrot.lane.b32.xlu0 %v40, 120
  %v42 = vpop.permute.xlu0 %41
  %vm43 = vcmask 1048512
  %44 = vst.msk [vmem:[%s1] sm:$0xff] %vm43, %v42
  %s45 = scalar_lea.vmem %s0, 143
  %v46 = vld [vmem:[%s45] sm:$0x1]
  %47 = vrot.lane.b32.xlu0 %v46, 120
  %v48 = vpop.permute.xlu0 %47
  %vm49 = vcmask 1048512
  %s50 = scalar_lea.vmem %s1, 8
  %51 = vst.msk [vmem:[%s50] sm:$0x1] %vm49, %v48
  %s52 = scalar_lea.vmem %s0, 14
  %s53 = smov 3
  %v54 = vld [vmem:[%s52] ss:$16 sm:%s53]
  %s55 = scalar_lea.vmem %s0, 14
  %s56 = smov 12
  %v57 = vld [vmem:[%s55] ss:$16 sm:%s56]
  %vm58 = vcmask 1043458
  %v59 = vsel %vm58, %v57, %v54
  %s60 = scalar_lea.vmem %s0, 14
  %s61 = smov 48
  %v62 = vld [vmem:[%s60] ss:$16 sm:%s61]
  %vm63 = vcmask 1045508
  %v64 = vsel %vm63, %v62, %v59
  %s65 = scalar_lea.vmem %s0, 14
  %s66 = smov 192
  %v67 = vld [vmem:[%s65] ss:$16 sm:%s66]
  %vm68 = vcmask 1047558
  %v69 = vsel %vm68, %v67, %v64
  %70 = vrot.lane.b32.xlu0 %v69, 112
  %v71 = vpop.permute.xlu0 %70
  %vm72 = vcmask 982912
  %73 = vst.msk [vmem:[%s1] sm:$0xff] %vm72, %v71
  %s74 = scalar_lea.vmem %s0, 142
  %v75 = vld [vmem:[%s74] sm:$0x1]
  %76 = vrot.lane.b32.xlu0 %v75, 112
  %v77 = vpop.permute.xlu0 %76
  %vm78 = vcmask 982912
  %s79 = scalar_lea.vmem %s1, 8
  %80 = vst.msk [vmem:[%s79] sm:$0x1] %vm78, %v77
  %s81 = scalar_lea.vmem %s0, 13
  %s82 = smov 3
  %v83 = vld [vmem:[%s81] ss:$16 sm:%s82]
  %s84 = scalar_lea.vmem %s0, 13
  %s85 = smov 12
  %v86 = vld [vmem:[%s84] ss:$16 sm:%s85]
  %vm87 = vcmask 1043458
  %v88 = vsel %vm87, %v86, %v83
  %s89 = scalar_lea.vmem %s0, 13
  %s90 = smov 48
  %v91 = vld [vmem:[%s89] ss:$16 sm:%s90]
  %vm92 = vcmask 1045508
  %v93 = vsel %vm92, %v91, %v88
  %s94 = scalar_lea.vmem %s0, 13
  %s95 = smov 192
  %v96 = vld [vmem:[%s94] ss:$16 sm:%s95]
  %vm97 = vcmask 1047558
  %v98 = vsel %vm97, %v96, %v93
  %99 = vrot.lane.b32.xlu0 %v98, 104
  %v100 = vpop.permute.xlu0 %99
  %vm101 = vcmask 917312
  %102 = vst.msk [vmem:[%s1] sm:$0xff] %vm101, %v100
  %s103 = scalar_lea.vmem %s0, 141
  %v104 = vld [vmem:[%s103] sm:$0x1]
  %105 = vrot.lane.b32.xlu0 %v104, 104
  %v106 = vpop.permute.xlu0 %105
  %vm107 = vcmask 917312
  %s108 = scalar_lea.vmem %s1, 8
  %109 = vst.msk [vmem:[%s108] sm:$0x1] %vm107, %v106
  %s110 = scalar_lea.vmem %s0, 12
  %s111 = smov 3
  %v112 = vld [vmem:[%s110] ss:$16 sm:%s111]
  %s113 = scalar_lea.vmem %s0, 12
  %s114 = smov 12
  %v115 = vld [vmem:[%s113] ss:$16 sm:%s114]
  %vm116 = vcmask 1043458
  %v117 = vsel %vm116, %v115, %v112
  %s118 = scalar_lea.vmem %s0, 12
  %s119 = smov 48
  %v120 = vld [vmem:[%s118] ss:$16 sm:%s119]
  %vm121 = vcmask 1045508
  %v122 = vsel %vm121, %v120, %v117
  %s123 = scalar_lea.vmem %s0, 12
  %s124 = smov 192
  %v125 = vld [vmem:[%s123] ss:$16 sm:%s124]
  %vm126 = vcmask 1047558
  %v127 = vsel %vm126, %v125, %v122
  %128 = vrot.lane.b32.xlu0 %v127, 96
  %v129 = vpop.permute.xlu0 %128
  %vm130 = vcmask 851712
  %131 = vst.msk [vmem:[%s1] sm:$0xff] %vm130, %v129
  %s132 = scalar_lea.vmem %s0, 140
  %v133 = vld [vmem:[%s132] sm:$0x1]
  %134 = vrot.lane.b32.xlu0 %v133, 96
  %v135 = vpop.permute.xlu0 %134
  %vm136 = vcmask 851712
  %s137 = scalar_lea.vmem %s1, 8
  %138 = vst.msk [vmem:[%s137] sm:$0x1] %vm136, %v135
  %s139 = scalar_lea.vmem %s0, 11
  %s140 = smov 3
  %v141 = vld [vmem:[%s139] ss:$16 sm:%s140]
  %s142 = scalar_lea.vmem %s0, 11
  %s143 = smov 12
  %v144 = vld [vmem:[%s142] ss:$16 sm:%s143]
  %vm145 = vcmask 1043458
  %v146 = vsel %vm145, %v144, %v141
  %s147 = scalar_lea.vmem %s0, 11
  %s148 = smov 48
  %v149 = vld [vmem:[%s147] ss:$16 sm:%s148]
  %vm150 = vcmask 1045508
  %v151 = vsel %vm150, %v149, %v146
  %s152 = scalar_lea.vmem %s0, 11
  %s153 = smov 192
  %v154 = vld [vmem:[%s152] ss:$16 sm:%s153]
  %vm155 = vcmask 1047558
  %v156 = vsel %vm155, %v154, %v151
  %157 = vrot.lane.b32.xlu0 %v156, 88
  %v158 = vpop.permute.xlu0 %157
  %vm159 = vcmask 786112
  %160 = vst.msk [vmem:[%s1] sm:$0xff] %vm159, %v158
  %s161 = scalar_lea.vmem %s0, 139
  %v162 = vld [vmem:[%s161] sm:$0x1]
  %163 = vrot.lane.b32.xlu0 %v162, 88
  %v164 = vpop.permute.xlu0 %163
  %vm165 = vcmask 786112
  %s166 = scalar_lea.vmem %s1, 8
  %167 = vst.msk [vmem:[%s166] sm:$0x1] %vm165, %v164
  %s168 = scalar_lea.vmem %s0, 10
  %s169 = smov 3
  %v170 = vld [vmem:[%s168] ss:$16 sm:%s169]
  %s171 = scalar_lea.vmem %s0, 10
  %s172 = smov 12
  %v173 = vld [vmem:[%s171] ss:$16 sm:%s172]
  %vm174 = vcmask 1043458
  %v175 = vsel %vm174, %v173, %v170
  %s176 = scalar_lea.vmem %s0, 10
  %s177 = smov 48
  %v178 = vld [vmem:[%s176] ss:$16 sm:%s177]
  %vm179 = vcmask 1045508
  %v180 = vsel %vm179, %v178, %v175
  %s181 = scalar_lea.vmem %s0, 10
  %s182 = smov 192
  %v183 = vld [vmem:[%s181] ss:$16 sm:%s182]
  %vm184 = vcmask 1047558
  %v185 = vsel %vm184, %v183, %v180
  %186 = vrot.lane.b32.xlu0 %v185, 80
  %v187 = vpop.permute.xlu0 %186
  %vm188 = vcmask 720512
  %189 = vst.msk [vmem:[%s1] sm:$0xff] %vm188, %v187
  %s190 = scalar_lea.vmem %s0, 138
  %v191 = vld [vmem:[%s190] sm:$0x1]
  %192 = vrot.lane.b32.xlu0 %v191, 80
  %v193 = vpop.permute.xlu0 %192
  %vm194 = vcmask 720512
  %s195 = scalar_lea.vmem %s1, 8
  %196 = vst.msk [vmem:[%s195] sm:$0x1] %vm194, %v193
  %s197 = scalar_lea.vmem %s0, 9
  %s198 = smov 3
  %v199 = vld [vmem:[%s197] ss:$16 sm:%s198]
  %s200 = scalar_lea.vmem %s0, 9
  %s201 = smov 12
  %v202 = vld [vmem:[%s200] ss:$16 sm:%s201]
  %vm203 = vcmask 1043458
  %v204 = vsel %vm203, %v202, %v199
  %s205 = scalar_lea.vmem %s0, 9
  %s206 = smov 48
  %v207 = vld [vmem:[%s205] ss:$16 sm:%s206]
  %vm208 = vcmask 1045508
  %v209 = vsel %vm208, %v207, %v204
  %s210 = scalar_lea.vmem %s0, 9
  %s211 = smov 192
  %v212 = vld [vmem:[%s210] ss:$16 sm:%s211]
  %vm213 = vcmask 1047558
  %v214 = vsel %vm213, %v212, %v209
  %215 = vrot.lane.b32.xlu0 %v214, 72
  %v216 = vpop.permute.xlu0 %215
  %vm217 = vcmask 654912
  %218 = vst.msk [vmem:[%s1] sm:$0xff] %vm217, %v216
  %s219 = scalar_lea.vmem %s0, 137
  %v220 = vld [vmem:[%s219] sm:$0x1]
  %221 = vrot.lane.b32.xlu0 %v220, 72
  %v222 = vpop.permute.xlu0 %221
  %vm223 = vcmask 654912
  %s224 = scalar_lea.vmem %s1, 8
  %225 = vst.msk [vmem:[%s224] sm:$0x1] %vm223, %v222
  %s226 = scalar_lea.vmem %s0, 8
  %s227 = smov 3
  %v228 = vld [vmem:[%s226] ss:$16 sm:%s227]
  %s229 = scalar_lea.vmem %s0, 8
  %s230 = smov 12
  %v231 = vld [vmem:[%s229] ss:$16 sm:%s230]
  %vm232 = vcmask 1043458
  %v233 = vsel %vm232, %v231, %v228
  %s234 = scalar_lea.vmem %s0, 8
  %s235 = smov 48
  %v236 = vld [vmem:[%s234] ss:$16 sm:%s235]
  %vm237 = vcmask 1045508
  %v238 = vsel %vm237, %v236, %v233
  %s239 = scalar_lea.vmem %s0, 8
  %s240 = smov 192
  %v241 = vld [vmem:[%s239] ss:$16 sm:%s240]
  %vm242 = vcmask 1047558
  %v243 = vsel %vm242, %v241, %v238
  %244 = vrot.lane.b32.xlu0 %v243, 64
  %v245 = vpop.permute.xlu0 %244
  %vm246 = vcmask 589312
  %247 = vst.msk [vmem:[%s1] sm:$0xff] %vm246, %v245
  %s248 = scalar_lea.vmem %s0, 136
  %v249 = vld [vmem:[%s248] sm:$0x1]
  %250 = vrot.lane.b32.xlu0 %v249, 64
  %v251 = vpop.permute.xlu0 %250
  %vm252 = vcmask 589312
  %s253 = scalar_lea.vmem %s1, 8
  %254 = vst.msk [vmem:[%s253] sm:$0x1] %vm252, %v251
  %s255 = scalar_lea.vmem %s0, 7
  %s256 = smov 3
  %v257 = vld [vmem:[%s255] ss:$16 sm:%s256]
  %s258 = scalar_lea.vmem %s0, 7
  %s259 = smov 12
  %v260 = vld [vmem:[%s258] ss:$16 sm:%s259]
  %vm261 = vcmask 1043458
  %v262 = vsel %vm261, %v260, %v257
  %s263 = scalar_lea.vmem %s0, 7
  %s264 = smov 48
  %v265 = vld [vmem:[%s263] ss:$16 sm:%s264]
  %vm266 = vcmask 1045508
  %v267 = vsel %vm266, %v265, %v262
  %s268 = scalar_lea.vmem %s0, 7
  %s269 = smov 192
  %v270 = vld [vmem:[%s268] ss:$16 sm:%s269]
  %vm271 = vcmask 1047558
  %v272 = vsel %vm271, %v270, %v267
  %273 = vrot.lane.b32.xlu0 %v272, 56
  %v274 = vpop.permute.xlu0 %273
  %vm275 = vcmask 523712
  %276 = vst.msk [vmem:[%s1] sm:$0xff] %vm275, %v274
  %s277 = scalar_lea.vmem %s0, 135
  %v278 = vld [vmem:[%s277] sm:$0x1]
  %279 = vrot.lane.b32.xlu0 %v278, 56
  %v280 = vpop.permute.xlu0 %279
  %vm281 = vcmask 523712
  %s282 = scalar_lea.vmem %s1, 8
  %283 = vst.msk [vmem:[%s282] sm:$0x1] %vm281, %v280
  %s284 = scalar_lea.vmem %s0, 6
  %s285 = smov 3
  %v286 = vld [vmem:[%s284] ss:$16 sm:%s285]
  %s287 = scalar_lea.vmem %s0, 6
  %s288 = smov 12
  %v289 = vld [vmem:[%s287] ss:$16 sm:%s288]
  %vm290 = vcmask 1043458
  %v291 = vsel %vm290, %v289, %v286
  %s292 = scalar_lea.vmem %s0, 6
  %s293 = smov 48
  %v294 = vld [vmem:[%s292] ss:$16 sm:%s293]
  %vm295 = vcmask 1045508
  %v296 = vsel %vm295, %v294, %v291
  %s297 = scalar_lea.vmem %s0, 6
  %s298 = smov 192
  %v299 = vld [vmem:[%s297] ss:$16 sm:%s298]
  %vm300 = vcmask 1047558
  %v301 = vsel %vm300, %v299, %v296
  %302 = vrot.lane.b32.xlu0 %v301, 48
  %v303 = vpop.permute.xlu0 %302
  %vm304 = vcmask 458112
  %305 = vst.msk [vmem:[%s1] sm:$0xff] %vm304, %v303
  %s306 = scalar_lea.vmem %s0, 134
  %v307 = vld [vmem:[%s306] sm:$0x1]
  %308 = vrot.lane.b32.xlu0 %v307, 48
  %v309 = vpop.permute.xlu0 %308
  %vm310 = vcmask 458112
  %s311 = scalar_lea.vmem %s1, 8
  %312 = vst.msk [vmem:[%s311] sm:$0x1] %vm310, %v309
  %s313 = scalar_lea.vmem %s0, 5
  %s314 = smov 3
  %v315 = vld [vmem:[%s313] ss:$16 sm:%s314]
  %s316 = scalar_lea.vmem %s0, 5
  %s317 = smov 12
  %v318 = vld [vmem:[%s316] ss:$16 sm:%s317]
  %vm319 = vcmask 1043458
  %v320 = vsel %vm319, %v318, %v315
  %s321 = scalar_lea.vmem %s0, 5
  %s322 = smov 48
  %v323 = vld [vmem:[%s321] ss:$16 sm:%s322]
  %vm324 = vcmask 1045508
  %v325 = vsel %vm324, %v323, %v320
  %s326 = scalar_lea.vmem %s0, 5
  %s327 = smov 192
  %v328 = vld [vmem:[%s326] ss:$16 sm:%s327]
  %vm329 = vcmask 1047558
  %v330 = vsel %vm329, %v328, %v325
  %331 = vrot.lane.b32.xlu0 %v330, 40
  %v332 = vpop.permute.xlu0 %331
  %vm333 = vcmask 392512
  %334 = vst.msk [vmem:[%s1] sm:$0xff] %vm333, %v332
  %s335 = scalar_lea.vmem %s0, 133
  %v336 = vld [vmem:[%s335] sm:$0x1]
  %337 = vrot.lane.b32.xlu0 %v336, 40
  %v338 = vpop.permute.xlu0 %337
  %vm339 = vcmask 392512
  %s340 = scalar_lea.vmem %s1, 8
  %341 = vst.msk [vmem:[%s340] sm:$0x1] %vm339, %v338
  %s342 = scalar_lea.vmem %s0, 4
  %s343 = smov 3
  %v344 = vld [vmem:[%s342] ss:$16 sm:%s343]
  %s345 = scalar_lea.vmem %s0, 4
  %s346 = smov 12
  %v347 = vld [vmem:[%s345] ss:$16 sm:%s346]
  %vm348 = vcmask 1043458
  %v349 = vsel %vm348, %v347, %v344
  %s350 = scalar_lea.vmem %s0, 4
  %s351 = smov 48
  %v352 = vld [vmem:[%s350] ss:$16 sm:%s351]
  %vm353 = vcmask 1045508
  %v354 = vsel %vm353, %v352, %v349
  %s355 = scalar_lea.vmem %s0, 4
  %s356 = smov 192
  %v357 = vld [vmem:[%s355] ss:$16 sm:%s356]
  %vm358 = vcmask 1047558
  %v359 = vsel %vm358, %v357, %v354
  %360 = vrot.lane.b32.xlu0 %v359, 32
  %v361 = vpop.permute.xlu0 %360
  %vm362 = vcmask 326912
  %363 = vst.msk [vmem:[%s1] sm:$0xff] %vm362, %v361
  %s364 = scalar_lea.vmem %s0, 132
  %v365 = vld [vmem:[%s364] sm:$0x1]
  %366 = vrot.lane.b32.xlu0 %v365, 32
  %v367 = vpop.permute.xlu0 %366
  %vm368 = vcmask 326912
  %s369 = scalar_lea.vmem %s1, 8
  %370 = vst.msk [vmem:[%s369] sm:$0x1] %vm368, %v367
  %s371 = scalar_lea.vmem %s0, 3
  %s372 = smov 3
  %v373 = vld [vmem:[%s371] ss:$16 sm:%s372]
  %s374 = scalar_lea.vmem %s0, 3
  %s375 = smov 12
  %v376 = vld [vmem:[%s374] ss:$16 sm:%s375]
  %vm377 = vcmask 1043458
  %v378 = vsel %vm377, %v376, %v373
  %s379 = scalar_lea.vmem %s0, 3
  %s380 = smov 48
  %v381 = vld [vmem:[%s379] ss:$16 sm:%s380]
  %vm382 = vcmask 1045508
  %v383 = vsel %vm382, %v381, %v378
  %s384 = scalar_lea.vmem %s0, 3
  %s385 = smov 192
  %v386 = vld [vmem:[%s384] ss:$16 sm:%s385]
  %vm387 = vcmask 1047558
  %v388 = vsel %vm387, %v386, %v383
  %389 = vrot.lane.b32.xlu0 %v388, 24
  %v390 = vpop.permute.xlu0 %389
  %vm391 = vcmask 261312
  %392 = vst.msk [vmem:[%s1] sm:$0xff] %vm391, %v390
  %s393 = scalar_lea.vmem %s0, 131
  %v394 = vld [vmem:[%s393] sm:$0x1]
  %395 = vrot.lane.b32.xlu0 %v394, 24
  %v396 = vpop.permute.xlu0 %395
  %vm397 = vcmask 261312
  %s398 = scalar_lea.vmem %s1, 8
  %399 = vst.msk [vmem:[%s398] sm:$0x1] %vm397, %v396
  %s400 = scalar_lea.vmem %s0, 2
  %s401 = smov 3
  %v402 = vld [vmem:[%s400] ss:$16 sm:%s401]
  %s403 = scalar_lea.vmem %s0, 2
  %s404 = smov 12
  %v405 = vld [vmem:[%s403] ss:$16 sm:%s404]
  %vm406 = vcmask 1043458
  %v407 = vsel %vm406, %v405, %v402
  %s408 = scalar_lea.vmem %s0, 2
  %s409 = smov 48
  %v410 = vld [vmem:[%s408] ss:$16 sm:%s409]
  %vm411 = vcmask 1045508
  %v412 = vsel %vm411, %v410, %v407
  %s413 = scalar_lea.vmem %s0, 2
  %s414 = smov 192
  %v415 = vld [vmem:[%s413] ss:$16 sm:%s414]
  %vm416 = vcmask 1047558
  %v417 = vsel %vm416, %v415, %v412
  %418 = vrot.lane.b32.xlu0 %v417, 16
  %v419 = vpop.permute.xlu0 %418
  %vm420 = vcmask 195712
  %421 = vst.msk [vmem:[%s1] sm:$0xff] %vm420, %v419
  %s422 = scalar_lea.vmem %s0, 130
  %v423 = vld [vmem:[%s422] sm:$0x1]
  %424 = vrot.lane.b32.xlu0 %v423, 16
  %v425 = vpop.permute.xlu0 %424
  %vm426 = vcmask 195712
  %s427 = scalar_lea.vmem %s1, 8
  %428 = vst.msk [vmem:[%s427] sm:$0x1] %vm426, %v425
  %s429 = scalar_lea.vmem %s0, 1
  %s430 = smov 3
  %v431 = vld [vmem:[%s429] ss:$16 sm:%s430]
  %s432 = scalar_lea.vmem %s0, 1
  %s433 = smov 12
  %v434 = vld [vmem:[%s432] ss:$16 sm:%s433]
  %vm435 = vcmask 1043458
  %v436 = vsel %vm435, %v434, %v431
  %s437 = scalar_lea.vmem %s0, 1
  %s438 = smov 48
  %v439 = vld [vmem:[%s437] ss:$16 sm:%s438]
  %vm440 = vcmask 1045508
  %v441 = vsel %vm440, %v439, %v436
  %s442 = scalar_lea.vmem %s0, 1
  %s443 = smov 192
  %v444 = vld [vmem:[%s442] ss:$16 sm:%s443]
  %vm445 = vcmask 1047558
  %v446 = vsel %vm445, %v444, %v441
  %447 = vrot.lane.b32.xlu0 %v446, 8
  %v448 = vpop.permute.xlu0 %447
  %vm449 = vcmask 130112
  %450 = vst.msk [vmem:[%s1] sm:$0xff] %vm449, %v448
  %s451 = scalar_lea.vmem %s0, 129
  %v452 = vld [vmem:[%s451] sm:$0x1]
  %453 = vrot.lane.b32.xlu0 %v452, 8
  %v454 = vpop.permute.xlu0 %453
  %vm455 = vcmask 130112
  %s456 = scalar_lea.vmem %s1, 8
  %457 = vst.msk [vmem:[%s456] sm:$0x1] %vm455, %v454

// kernel: depthwise_separable_block.1
$region0: #{depthwise_separable_block.1}
  #allocation0 [shape = 'u32[]', space=smem, size = 0x4, offset = 0x4, fixed_abs, tag = 'smem constant byte address 0x4 - core index']
  #allocation1 [shape = 'u32[144,128]{1,0:T(1,128)}', space=vmem, size = 0x12000, scoped, tag = 'internal scratch']
  %s0 = inlined_call_operand.vmem [shape: f32[256,128], index: 0, kind: input, shape index: {}, may-alias: {0,5}]
  %s1 = inlined_call_operand.vmem [shape: f32[9,128], index: 1, kind: input, shape index: {}]
  %s2 = inlined_call_operand.vmem [shape: bf16[128,128], index: 2, kind: input, shape index: {}]
  %s3 = inlined_call_operand.vmem [shape: f32[1,128], index: 3, kind: input, shape index: {}]
  %s4 = inlined_call_operand.vmem [shape: f32[1,128], index: 4, kind: input, shape index: {}]
  %s5 = inlined_call_operand.vmem [shape: f32[256,128], index: 5, kind: output, shape index: {}, may-alias: {0,5}]
  %s6 = sld [smem:[#allocation0]]
  $region53: #{depthwise_separable_block.1} parent=0
    _
  %s8 = ssub.s32 1, %s6
  %s9 = scalar_select 0, %s8, %s6
  loop: start=0, step=1, limit=4
  $region2: #{depthwise_separable_block.1} parent=0 // loop_pre_header
    _
  $region3: #{depthwise_separable_block.1} parent=0 // loop_header
    %s11 = sphi 0, %s15
    %p12 = scmp.ge.s32.totalorder %s11, 4
    %s21 = sphi 0, %s23
    %s24 = sphi 0, %s21
    %s25 = sphi 0, %s24
    %s41 = sphi 0, %s25
    %s45 = sphi 0, %s45
    %s47 = sphi 0, %s45
    %s48 = sphi 0, %s47
    %s62 = sphi 0, %s48
    %s66 = sphi 0, %s66
    %s68 = sphi 0, %s66
    %s69 = sphi 0, %s68
    %s83 = sphi 0, %s69
    %s87 = sphi 0, %s87
    %s89 = sphi 0, %s87
    %s90 = sphi 0, %s89
    %s104 = sphi 0, %s90
    %s108 = sphi 0, %s108
    %s110 = sphi 0, %s108
    %s111 = sphi 0, %s110
    %s125 = sphi 0, %s111
    %s131 = sphi 0, %s133
    %s134 = sphi 0, %s131
    %s135 = sphi 0, %s134
    %s151 = sphi 0, %s135
  $region4: #{depthwise_separable_block.1} parent=0 // loop_header_branch
    %14 = sbr.rel (%p12) target = $region8
  $region5: #{depthwise_separable_block.1} parent=0 // loop_body
    %s16 = ssub.s32 %s11, 1
    %s17 = ssub.s32 %s11, 2
    %s18 = sadd.s32 %s11, 1
    %s19 = ssub.s32 %s11, %s18
    %p20 = scmp.eq.s32.totalorder %s19, 0
    %s22 = sadd.s32 %s21, 1
    %s23 = scalar_select %p20, %s21, %s22
    %p26 = pneg %p20
    %p27 = scmp.eq.s32.totalorder %s11, 1
    %p28 = por %p26, %p27
    %p29 = scmp.ne.s32.totalorder %s21, %s24
    %p30 = scmp.eq.s32.totalorder %s11, 0
    %p31 = por %p29, %p30
    %p32 = scmp.ne.s32.totalorder %s21, %s24
    %p33 = scmp.eq.s32.totalorder %s16, 1
    %p34 = por %p32, %p33
    %p35 = scmp.ne.s32.totalorder %s24, %s25
    %p36 = scmp.eq.s32.totalorder %s16, 0
    %p37 = por %p35, %p36
    %p38 = scmp.ne.s32.totalorder %s24, %s25
    %p39 = scmp.eq.s32.totalorder %s17, 1
    %p40 = por %p38, %p39
    %p42 = scmp.ne.s32.totalorder %s25, %s41
    %p43 = scmp.eq.s32.totalorder %s17, 0
    %p44 = por %p42, %p43
    %s46 = sadd.s32 %s45, 1
    %p49 = scmp.eq.s32.totalorder %s11, 1
    %p50 = scmp.ne.s32.totalorder %s45, %s47
    %p51 = scmp.eq.s32.totalorder %s11, 0
    %p52 = por %p50, %p51
    %p53 = scmp.ne.s32.totalorder %s45, %s47
    %p54 = scmp.eq.s32.totalorder %s16, 1
    %p55 = por %p53, %p54
    %p56 = scmp.ne.s32.totalorder %s47, %s48
    %p57 = scmp.eq.s32.totalorder %s16, 0
    %p58 = por %p56, %p57
    %p59 = scmp.ne.s32.totalorder %s47, %s48
    %p60 = scmp.eq.s32.totalorder %s17, 1
    %p61 = por %p59, %p60
    %p63 = scmp.ne.s32.totalorder %s48, %s62
    %p64 = scmp.eq.s32.totalorder %s17, 0
    %p65 = por %p63, %p64
    %s67 = sadd.s32 %s66, 1
    %p70 = scmp.eq.s32.totalorder %s11, 1
    %p71 = scmp.ne.s32.totalorder %s66, %s68
    %p72 = scmp.eq.s32.totalorder %s11, 0
    %p73 = por %p71, %p72
    %p74 = scmp.ne.s32.totalorder %s66, %s68
    %p75 = scmp.eq.s32.totalorder %s16, 1
    %p76 = por %p74, %p75
    %p77 = scmp.ne.s32.totalorder %s68, %s69
    %p78 = scmp.eq.s32.totalorder %s16, 0
    %p79 = por %p77, %p78
    %p80 = scmp.ne.s32.totalorder %s68, %s69
    %p81 = scmp.eq.s32.totalorder %s17, 1
    %p82 = por %p80, %p81
    %p84 = scmp.ne.s32.totalorder %s69, %s83
    %p85 = scmp.eq.s32.totalorder %s17, 0
    %p86 = por %p84, %p85
    %s88 = sadd.s32 %s87, 1
    %p91 = scmp.eq.s32.totalorder %s11, 1
    %p92 = scmp.ne.s32.totalorder %s87, %s89
    %p93 = scmp.eq.s32.totalorder %s11, 0
    %p94 = por %p92, %p93
    %p95 = scmp.ne.s32.totalorder %s87, %s89
    %p96 = scmp.eq.s32.totalorder %s16, 1
    %p97 = por %p95, %p96
    %p98 = scmp.ne.s32.totalorder %s89, %s90
    %p99 = scmp.eq.s32.totalorder %s16, 0
    %p100 = por %p98, %p99
    %p101 = scmp.ne.s32.totalorder %s89, %s90
    %p102 = scmp.eq.s32.totalorder %s17, 1
    %p103 = por %p101, %p102
    %p105 = scmp.ne.s32.totalorder %s90, %s104
    %p106 = scmp.eq.s32.totalorder %s17, 0
    %p107 = por %p105, %p106
    %s109 = sadd.s32 %s108, 1
    %p112 = scmp.eq.s32.totalorder %s11, 1
    %p113 = scmp.ne.s32.totalorder %s108, %s110
    %p114 = scmp.eq.s32.totalorder %s11, 0
    %p115 = por %p113, %p114
    %p116 = scmp.ne.s32.totalorder %s108, %s110
    %p117 = scmp.eq.s32.totalorder %s16, 1
    %p118 = por %p116, %p117
    %p119 = scmp.ne.s32.totalorder %s110, %s111
    %p120 = scmp.eq.s32.totalorder %s16, 0
    %p121 = por %p119, %p120
    %p122 = scmp.ne.s32.totalorder %s110, %s111
    %p123 = scmp.eq.s32.totalorder %s17, 1
    %p124 = por %p122, %p123
    %p126 = scmp.ne.s32.totalorder %s111, %s125
    %p127 = scmp.eq.s32.totalorder %s17, 0
    %p128 = por %p126, %p127
    %s129 = ssub.s32 %s11, %s18
    %p130 = scmp.eq.s32.totalorder %s129, 0
    %s132 = sadd.s32 %s131, 1
    %s133 = scalar_select %p130, %s131, %s132
    %p136 = pneg %p130
    %p137 = scmp.eq.s32.totalorder %s11, 1
    %p138 = por %p136, %p137
    %p139 = scmp.ne.s32.totalorder %s131, %s134
    %p140 = scmp.eq.s32.totalorder %s11, 0
    %p141 = por %p139, %p140
    %p142 = scmp.ne.s32.totalorder %s131, %s134
    %p143 = scmp.eq.s32.totalorder %s16, 1
    %p144 = por %p142, %p143
    %p145 = scmp.ne.s32.totalorder %s134, %s135
    %p146 = scmp.eq.s32.totalorder %s16, 0
    %p147 = por %p145, %p146
    %p148 = scmp.ne.s32.totalorder %s134, %s135
    %p149 = scmp.eq.s32.totalorder %s17, 1
    %p150 = por %p148, %p149
    %p152 = scmp.ne.s32.totalorder %s135, %s151
    %p153 = scmp.eq.s32.totalorder %s17, 0
    %p154 = por %p152, %p153
    %p155 = scmp.le.s32.totalorder 1, %s11
    %p156 = scmp.lt.s32.totalorder %s11, 3
    %p157 = pnand %p155, %p156
    %p158 = pneg %p157
    // Predicated region
    $region9: #{depthwise_separable_block.1} parent=5 // pred_check
      _
    $region10: #{depthwise_separable_block.1} parent=5 // pred_check_branch
      %160 = sbr.rel (%p157) target = $region12
    $region11: #{depthwise_separable_block.1} parent=5 // pred_region
      %s161 = ssub.s32 %s11, 1
      // Predicated region
      $region13: #{depthwise_separable_block.1} parent=11 // pred_check
        %p162 = pneg %p58
      $region14: #{depthwise_separable_block.1} parent=11 // pred_check_branch
        %164 = sbr.rel (%p162) target = $region16
      $region15: #{depthwise_separable_block.1} parent=11 // pred_region
        _
      $region16: #{depthwise_separable_block.1} parent=11 // pred_fallthru
        _
      // Predicated region
      $region17: #{depthwise_separable_block.1} parent=11 // pred_check
        %p165 = pneg %p79
      $region18: #{depthwise_separable_block.1} parent=11 // pred_check_branch
        %167 = sbr.rel (%p165) target = $region20
      $region19: #{depthwise_separable_block.1} parent=11 // pred_region
        _
      $region20: #{depthwise_separable_block.1} parent=11 // pred_fallthru
        _
      // Predicated region
      $region21: #{depthwise_separable_block.1} parent=11 // pred_check
        %p168 = pneg %p100
      $region22: #{depthwise_separable_block.1} parent=11 // pred_check_branch
        %170 = sbr.rel (%p168) target = $region24
      $region23: #{depthwise_separable_block.1} parent=11 // pred_region
        _
      $region24: #{depthwise_separable_block.1} parent=11 // pred_fallthru
        _
      // Predicated region
      $region25: #{depthwise_separable_block.1} parent=11 // pred_check
        %p171 = pneg %p121
      $region26: #{depthwise_separable_block.1} parent=11 // pred_check_branch
        %173 = sbr.rel (%p171) target = $region28
      $region27: #{depthwise_separable_block.1} parent=11 // pred_region
        _
      $region28: #{depthwise_separable_block.1} parent=11 // pred_fallthru
        _
    $region12: #{depthwise_separable_block.1} parent=5 // pred_fallthru
      _
    %p174 = scmp.lt.s32.totalorder %s11, 2
    // Predicated region
    $region29: #{depthwise_separable_block.1} parent=5 // pred_check
      %p175 = pneg %p174
    $region30: #{depthwise_separable_block.1} parent=5 // pred_check_branch
      %177 = sbr.rel (%p175) target = $region32
    $region31: #{depthwise_separable_block.1} parent=5 // pred_region
      // Predicated region
      $region33: #{depthwise_separable_block.1} parent=31 // pred_check
        %p178 = pneg %p31
      $region34: #{depthwise_separable_block.1} parent=31 // pred_check_branch
        %180 = sbr.rel (%p178) target = $region36
      $region35: #{depthwise_separable_block.1} parent=31 // pred_region
        %s181 = smul.u32 16, %s11
        %p182 = scmp.lt.s32.totalorder %s181, 31
        %s183 = scalar_select %p182, %s181, 31
        %s184 = smul.addr %s183, 8
        %s185 = scalar_lea.vmem %s0, %s184
        %s186 = smul.u32 16, %s11
      $region36: #{depthwise_separable_block.1} parent=31 // pred_fallthru
        _
    $region32: #{depthwise_separable_block.1} parent=5 // pred_fallthru
      _
    %p187 = scmp.le.s32.totalorder 1, %s11
    %p188 = scmp.lt.s32.totalorder %s11, 3
    %p189 = pnand %p187, %p188
    %p190 = pneg %p189
    // Predicated region
    $region37: #{depthwise_separable_block.1} parent=5 // pred_check
      _
    $region38: #{depthwise_separable_block.1} parent=5 // pred_check_branch
      %192 = sbr.rel (%p189) target = $region40
    $region39: #{depthwise_separable_block.1} parent=5 // pred_region
      %s193 = ssub.s32 %s11, 1
      %s194 = smul.u32 16, %s16
      %p195 = scmp.lt.s32.totalorder %s194, 31
      %s196 = scalar_select %p195, %s194, 31
      %s197 = smul.addr %s196, 8
      %s198 = scalar_lea.vmem %s0, %s197
      %p199 = pneg %p37
      %p200 = pneg %p34
      %p201 = pneg %p58
      %p202 = pneg %p55
      %p203 = pneg %p79
      %p204 = pneg %p76
      %p205 = pneg %p100
      %p206 = pneg %p97
      %p207 = pneg %p121
      %p208 = pneg %p118
      %p209 = pneg %p147
      %p210 = pneg %p144
      %s211 = smul.u32 16, %s16
      %p212 = scmp.lt.s32.totalorder %s211, 31
      %s213 = scalar_select %p212, %s211, 31
      %s214 = smul.addr %s213, 8
      %s215 = scalar_lea.vmem %s5, %s214
      %s216 = smul.u32 16, %s16
      %p217 = scmp.lt.s32.totalorder %s216, 31
      %s218 = scalar_select %p217, %s216, 31
      %s219 = smul.addr %s218, 8
      %s220 = scalar_lea.vmem %s0, %s219
      %s221 = smul.u32 16, %s16
      %s222 = smul.u32 16, %s16
      %p223 = scmp.lt.s32.totalorder %s222, 31
      %s224 = scalar_select %p223, %s222, 31
      %s225 = smul.addr %s224, 8
      %s226 = scalar_lea.vmem %s5, %s225
      %s227 = smul.u32 16, %s16
      %v229 = vld [vmem:[%s220] sm:$0xff]
      %v230 = vld [vmem:[%s220 + $0x8] sm:$0xff]
      %v231 = vld [vmem:[%s220 + $0x10] sm:$0xff]
      %v232 = vld [vmem:[%s220 + $0x18] sm:$0xff]
      %v233 = vld [vmem:[%s220 + $0x20] sm:$0xff]
      %v234 = vld [vmem:[%s220 + $0x28] sm:$0xff]
      %v235 = vld [vmem:[%s220 + $0x30] sm:$0xff]
      %v236 = vld [vmem:[%s220 + $0x38] sm:$0xff]
      %v237 = vld [vmem:[%s220 + $0x40] sm:$0xff]
      %v238 = vld [vmem:[%s220 + $0x48] sm:$0xff]
      %v239 = vld [vmem:[%s220 + $0x50] sm:$0xff]
      %v240 = vld [vmem:[%s220 + $0x58] sm:$0xff]
      %v241 = vld [vmem:[%s220 + $0x60] sm:$0xff]
      %v242 = vld [vmem:[%s220 + $0x68] sm:$0xff]
      %v243 = vld [vmem:[%s220 + $0x70] sm:$0xff]
      %v244 = vld [vmem:[%s220 + $0x78] sm:$0xff]
      %v245 = vlaneseq
      %v246 = vshrl.u32 %v245, 7
      %v247 = vadd.s32 %v246, 8
      %v248 = vadd.s32 %v246, 16
      %v249 = vadd.s32 %v246, 24
      %v250 = vadd.s32 %v246, 32
      %v251 = vadd.s32 %v246, 40
      %v252 = vadd.s32 %v246, 48
      %v253 = vadd.s32 %v246, 56
      %v254 = vadd.s32 %v246, 64
      %v255 = vadd.s32 %v246, 72
      %v256 = vadd.s32 %v246, 80
      %v257 = vadd.s32 %v246, 88
      %v258 = vadd.s32 %v246, 96
      %v259 = vadd.s32 %v246, 104
      %v260 = vadd.s32 %v246, 112
      %v261 = vadd.s32 %v246, 120
      %vm262 = vcmp.lt.s32.totalorder %v246, 0
      %v263 = vsub.s32 0, %v246
      %v264 = vsel %vm262, %v263, %v246
      %v265 = vshrl.u32 %v264, 4
      %v266 = vand.u32 %v264, 15
      %v267 = vsub.s32 0, %v266
      %v268 = vsel %vm262, %v267, %v266
      %vm269 = vcmp.lt.s32.totalorder %v247, 0
      %v270 = vsub.s32 0, %v247
      %v271 = vsel %vm269, %v270, %v247
      %v272 = vshrl.u32 %v271, 4
      %v273 = vand.u32 %v271, 15
      %v274 = vsub.s32 0, %v273
      %v275 = vsel %vm269, %v274, %v273
      %vm276 = vcmp.lt.s32.totalorder %v248, 0
      %v277 = vsub.s32 0, %v248
      %v278 = vsel %vm276, %v277, %v248
      %v279 = vshrl.u32 %v278, 4
      %v280 = vand.u32 %v278, 15
      %v281 = vsub.s32 0, %v280
      %v282 = vsel %vm276, %v281, %v280
      %vm283 = vcmp.lt.s32.totalorder %v249, 0
      %v284 = vsub.s32 0, %v249
      %v285 = vsel %vm283, %v284, %v249
      %v286 = vshrl.u32 %v285, 4
      %v287 = vand.u32 %v285, 15
      %v288 = vsub.s32 0, %v287
      %v289 = vsel %vm283, %v288, %v287
      %vm290 = vcmp.lt.s32.totalorder %v250, 0
      %v291 = vsub.s32 0, %v250
      %v292 = vsel %vm290, %v291, %v250
      %v293 = vshrl.u32 %v292, 4
      %v294 = vand.u32 %v292, 15
      %v295 = vsub.s32 0, %v294
      %v296 = vsel %vm290, %v295, %v294
      %vm297 = vcmp.lt.s32.totalorder %v251, 0
      %v298 = vsub.s32 0, %v251
      %v299 = vsel %vm297, %v298, %v251
      %v300 = vshrl.u32 %v299, 4
      %v301 = vand.u32 %v299, 15
      %v302 = vsub.s32 0, %v301
      %v303 = vsel %vm297, %v302, %v301
      %vm304 = vcmp.lt.s32.totalorder %v252, 0
      %v305 = vsub.s32 0, %v252
      %v306 = vsel %vm304, %v305, %v252
      %v307 = vshrl.u32 %v306, 4
      %v308 = vand.u32 %v306, 15
      %v309 = vsub.s32 0, %v308
      %v310 = vsel %vm304, %v309, %v308
      %vm311 = vcmp.lt.s32.totalorder %v253, 0
      %v312 = vsub.s32 0, %v253
      %v313 = vsel %vm311, %v312, %v253
      %v314 = vshrl.u32 %v313, 4
      %v315 = vand.u32 %v313, 15
      %v316 = vsub.s32 0, %v315
      %v317 = vsel %vm311, %v316, %v315
      %vm318 = vcmp.lt.s32.totalorder %v254, 0
      %v319 = vsub.s32 0, %v254
      %v320 = vsel %vm318, %v319, %v254
      %v321 = vshrl.u32 %v320, 4
      %v322 = vand.u32 %v320, 15
      %v323 = vsub.s32 0, %v322
      %v324 = vsel %vm318, %v323, %v322
      %vm325 = vcmp.lt.s32.totalorder %v255, 0
      %v326 = vsub.s32 0, %v255
      %v327 = vsel %vm325, %v326, %v255
      %v328 = vshrl.u32 %v327, 4
      %v329 = vand.u32 %v327, 15
      %v330 = vsub.s32 0, %v329
      %v331 = vsel %vm325, %v330, %v329
      %vm332 = vcmp.lt.s32.totalorder %v256, 0
      %v333 = vsub.s32 0, %v256
      %v334 = vsel %vm332, %v333, %v256
      %v335 = vshrl.u32 %v334, 4
      %v336 = vand.u32 %v334, 15
      %v337 = vsub.s32 0, %v336
      %v338 = vsel %vm332, %v337, %v336
      %vm339 = vcmp.lt.s32.totalorder %v257, 0
      %v340 = vsub.s32 0, %v257
      %v341 = vsel %vm339, %v340, %v257
      %v342 = vshrl.u32 %v341, 4
      %v343 = vand.u32 %v341, 15
      %v344 = vsub.s32 0, %v343
      %v345 = vsel %vm339, %v344, %v343
      %vm346 = vcmp.lt.s32.totalorder %v258, 0
      %v347 = vsub.s32 0, %v258
      %v348 = vsel %vm346, %v347, %v258
      %v349 = vshrl.u32 %v348, 4
      %v350 = vand.u32 %v348, 15
      %v351 = vsub.s32 0, %v350
      %v352 = vsel %vm346, %v351, %v350
      %vm353 = vcmp.lt.s32.totalorder %v259, 0
      %v354 = vsub.s32 0, %v259
      %v355 = vsel %vm353, %v354, %v259
      %v356 = vshrl.u32 %v355, 4
      %v357 = vand.u32 %v355, 15
      %v358 = vsub.s32 0, %v357
      %v359 = vsel %vm353, %v358, %v357
      %vm360 = vcmp.lt.s32.totalorder %v260, 0
      %v361 = vsub.s32 0, %v260
      %v362 = vsel %vm360, %v361, %v260
      %v363 = vshrl.u32 %v362, 4
      %v364 = vand.u32 %v362, 15
      %v365 = vsub.s32 0, %v364
      %v366 = vsel %vm360, %v365, %v364
      %vm367 = vcmp.lt.s32.totalorder %v261, 0
      %v368 = vsub.s32 0, %v261
      %v369 = vsel %vm367, %v368, %v261
      %v370 = vshrl.u32 %v369, 4
      %v371 = vand.u32 %v369, 15
      %v372 = vsub.s32 0, %v371
      %v373 = vsel %vm367, %v372, %v371
      %vm374 = vcmp.ne.s32.totalorder %v268, 0
      %vm375 = vcmp.ne.s32.totalorder %v275, 0
      %vm376 = vcmp.ne.s32.totalorder %v282, 0
      %vm377 = vcmp.ne.s32.totalorder %v289, 0
      %vm378 = vcmp.ne.s32.totalorder %v296, 0
      %vm379 = vcmp.ne.s32.totalorder %v303, 0
      %vm380 = vcmp.ne.s32.totalorder %v310, 0
      %vm381 = vcmp.ne.s32.totalorder %v317, 0
      %vm382 = vcmp.ne.s32.totalorder %v324, 0
      %vm383 = vcmp.ne.s32.totalorder %v331, 0
      %vm384 = vcmp.ne.s32.totalorder %v338, 0
      %vm385 = vcmp.ne.s32.totalorder %v345, 0
      %vm386 = vcmp.ne.s32.totalorder %v352, 0
      %vm387 = vcmp.ne.s32.totalorder %v359, 0
      %vm388 = vcmp.ne.s32.totalorder %v366, 0
      %vm389 = vcmp.ne.s32.totalorder %v373, 0
      %vm390 = vcmp.lt.s32.totalorder %v268, 0
      %vm391 = vcmp.lt.s32.totalorder %v275, 0
      %vm392 = vcmp.lt.s32.totalorder %v282, 0
      %vm393 = vcmp.lt.s32.totalorder %v289, 0
      %vm394 = vcmp.lt.s32.totalorder %v296, 0
      %vm395 = vcmp.lt.s32.totalorder %v303, 0
      %vm396 = vcmp.lt.s32.totalorder %v310, 0
      %vm397 = vcmp.lt.s32.totalorder %v317, 0
      %vm398 = vcmp.lt.s32.totalorder %v324, 0
      %vm399 = vcmp.lt.s32.totalorder %v331, 0
      %vm400 = vcmp.lt.s32.totalorder %v338, 0
      %vm401 = vcmp.lt.s32.totalorder %v345, 0
      %vm402 = vcmp.lt.s32.totalorder %v352, 0
      %vm403 = vcmp.lt.s32.totalorder %v359, 0
      %vm404 = vcmp.lt.s32.totalorder %v366, 0
      %vm405 = vcmp.lt.s32.totalorder %v373, 0
      %vm406 = vmand %vm390, %vm374
      %vm407 = vmand %vm391, %vm375
      %vm408 = vmand %vm392, %vm376
      %vm409 = vmand %vm393, %vm377
      %vm410 = vmand %vm394, %vm378
      %vm411 = vmand %vm395, %vm379
      %vm412 = vmand %vm396, %vm380
      %vm413 = vmand %vm397, %vm381
      %vm414 = vmand %vm398, %vm382
      %vm415 = vmand %vm399, %vm383
      %vm416 = vmand %vm400, %vm384
      %vm417 = vmand %vm401, %vm385
      %vm418 = vmand %vm402, %vm386
      %vm419 = vmand %vm403, %vm387
      %vm420 = vmand %vm404, %vm388
      %vm421 = vmand %vm405, %vm389
      %v422 = vadd.s32 %v268, 16
      %v423 = vadd.s32 %v275, 16
      %v424 = vadd.s32 %v282, 16
      %v425 = vadd.s32 %v289, 16
      %v426 = vadd.s32 %v296, 16
      %v427 = vadd.s32 %v303, 16
      %v428 = vadd.s32 %v310, 16
      %v429 = vadd.s32 %v317, 16
      %v430 = vadd.s32 %v324, 16
      %v431 = vadd.s32 %v331, 16
      %v432 = vadd.s32 %v338, 16
      %v433 = vadd.s32 %v345, 16
      %v434 = vadd.s32 %v352, 16
      %v435 = vadd.s32 %v359, 16
      %v436 = vadd.s32 %v366, 16
      %v437 = vadd.s32 %v373, 16
      %v438 = vsel %vm406, %v422, %v268
      %v439 = vsel %vm407, %v423, %v275
      %v440 = vsel %vm408, %v424, %v282
      %v441 = vsel %vm409, %v425, %v289
      %v442 = vsel %vm410, %v426, %v296
      %v443 = vsel %vm411, %v427, %v303
      %v444 = vsel %vm412, %v428, %v310
      %v445 = vsel %vm413, %v429, %v317
      %v446 = vsel %vm414, %v430, %v324
      %v447 = vsel %vm415, %v431, %v331
      %v448 = vsel %vm416, %v432, %v338
      %v449 = vsel %vm417, %v433, %v345
      %v450 = vsel %vm418, %v434, %v352
      %v451 = vsel %vm419, %v435, %v359
      %v452 = vsel %vm420, %v436, %v366
      %v453 = vsel %vm421, %v437, %v373
      %v454 = vadd.s32 %v438, 4294967295
      %v455 = vadd.s32 %v439, 4294967295
      %v456 = vadd.s32 %v440, 4294967295
      %v457 = vadd.s32 %v441, 4294967295
      %v458 = vadd.s32 %v442, 4294967295
      %v459 = vadd.s32 %v443, 4294967295
      %v460 = vadd.s32 %v444, 4294967295
      %v461 = vadd.s32 %v445, 4294967295
      %v462 = vadd.s32 %v446, 4294967295
      %v463 = vadd.s32 %v447, 4294967295
      %v464 = vadd.s32 %v448, 4294967295
      %v465 = vadd.s32 %v449, 4294967295
      %v466 = vadd.s32 %v450, 4294967295
      %v467 = vadd.s32 %v451, 4294967295
      %v468 = vadd.s32 %v452, 4294967295
      %v469 = vadd.s32 %v453, 4294967295
      %vm470 = vcmp.ge.s32.totalorder %v454, 0
      %vm471 = vcmp.ge.s32.totalorder %v455, 0
      %vm472 = vcmp.ge.s32.totalorder %v456, 0
      %vm473 = vcmp.ge.s32.totalorder %v457, 0
      %vm474 = vcmp.ge.s32.totalorder %v458, 0
      %vm475 = vcmp.ge.s32.totalorder %v459, 0
      %vm476 = vcmp.ge.s32.totalorder %v460, 0
      %vm477 = vcmp.ge.s32.totalorder %v461, 0
      %vm478 = vcmp.ge.s32.totalorder %v462, 0
      %vm479 = vcmp.ge.s32.totalorder %v463, 0
      %vm480 = vcmp.ge.s32.totalorder %v464, 0
      %vm481 = vcmp.ge.s32.totalorder %v465, 0
      %vm482 = vcmp.ge.s32.totalorder %v466, 0
      %vm483 = vcmp.ge.s32.totalorder %v467, 0
      %vm484 = vcmp.ge.s32.totalorder %v468, 0
      %vm485 = vcmp.ge.s32.totalorder %v469, 0
      %vm486 = vcmp.lt.s32.totalorder %v454, 16
      %vm487 = vcmp.lt.s32.totalorder %v455, 16
      %vm488 = vcmp.lt.s32.totalorder %v456, 16
      %vm489 = vcmp.lt.s32.totalorder %v457, 16
      %vm490 = vcmp.lt.s32.totalorder %v458, 16
      %vm491 = vcmp.lt.s32.totalorder %v459, 16
      %vm492 = vcmp.lt.s32.totalorder %v460, 16
      %vm493 = vcmp.lt.s32.totalorder %v461, 16
      %vm494 = vcmp.lt.s32.totalorder %v462, 16
      %vm495 = vcmp.lt.s32.totalorder %v463, 16
      %vm496 = vcmp.lt.s32.totalorder %v464, 16
      %vm497 = vcmp.lt.s32.totalorder %v465, 16
      %vm498 = vcmp.lt.s32.totalorder %v466, 16
      %vm499 = vcmp.lt.s32.totalorder %v467, 16
      %vm500 = vcmp.lt.s32.totalorder %v468, 16
      %vm501 = vcmp.lt.s32.totalorder %v469, 16
      %vm502 = vmand %vm470, %vm486
      %vm503 = vmand %vm471, %vm487
      %vm504 = vmand %vm472, %vm488
      %vm505 = vmand %vm473, %vm489
      %vm506 = vmand %vm474, %vm490
      %vm507 = vmand %vm475, %vm491
      %vm508 = vmand %vm476, %vm492
      %vm509 = vmand %vm477, %vm493
      %vm510 = vmand %vm478, %vm494
      %vm511 = vmand %vm479, %vm495
      %vm512 = vmand %vm480, %vm496
      %vm513 = vmand %vm481, %vm497
      %vm514 = vmand %vm482, %vm498
      %vm515 = vmand %vm483, %vm499
      %vm516 = vmand %vm484, %vm500
      %vm517 = vmand %vm485, %vm501
      %v518 = vadd.s32 %v438, 1
      %v519 = vadd.s32 %v439, 1
      %v520 = vadd.s32 %v440, 1
      %v521 = vadd.s32 %v441, 1
      %v522 = vadd.s32 %v442, 1
      %v523 = vadd.s32 %v443, 1
      %v524 = vadd.s32 %v444, 1
      %v525 = vadd.s32 %v445, 1
      %v526 = vadd.s32 %v446, 1
      %v527 = vadd.s32 %v447, 1
      %v528 = vadd.s32 %v448, 1
      %v529 = vadd.s32 %v449, 1
      %v530 = vadd.s32 %v450, 1
      %v531 = vadd.s32 %v451, 1
      %v532 = vadd.s32 %v452, 1
      %v533 = vadd.s32 %v453, 1
      %vm534 = vcmp.ge.s32.totalorder %v518, 0
      %vm535 = vcmp.ge.s32.totalorder %v519, 0
      %vm536 = vcmp.ge.s32.totalorder %v520, 0
      %vm537 = vcmp.ge.s32.totalorder %v521, 0
      %vm538 = vcmp.ge.s32.totalorder %v522, 0
      %vm539 = vcmp.ge.s32.totalorder %v523, 0
      %vm540 = vcmp.ge.s32.totalorder %v524, 0
      %vm541 = vcmp.ge.s32.totalorder %v525, 0
      %vm542 = vcmp.ge.s32.totalorder %v526, 0
      %vm543 = vcmp.ge.s32.totalorder %v527, 0
      %vm544 = vcmp.ge.s32.totalorder %v528, 0
      %vm545 = vcmp.ge.s32.totalorder %v529, 0
      %vm546 = vcmp.ge.s32.totalorder %v530, 0
      %vm547 = vcmp.ge.s32.totalorder %v531, 0
      %vm548 = vcmp.ge.s32.totalorder %v532, 0
      %vm549 = vcmp.ge.s32.totalorder %v533, 0
      %vm550 = vcmp.lt.s32.totalorder %v518, 16
      %vm551 = vcmp.lt.s32.totalorder %v519, 16
      %vm552 = vcmp.lt.s32.totalorder %v520, 16
      %vm553 = vcmp.lt.s32.totalorder %v521, 16
      %vm554 = vcmp.lt.s32.totalorder %v522, 16
      %vm555 = vcmp.lt.s32.totalorder %v523, 16
      %vm556 = vcmp.lt.s32.totalorder %v524, 16
      %vm557 = vcmp.lt.s32.totalorder %v525, 16
      %vm558 = vcmp.lt.s32.totalorder %v526, 16
      %vm559 = vcmp.lt.s32.totalorder %v527, 16
      %vm560 = vcmp.lt.s32.totalorder %v528, 16
      %vm561 = vcmp.lt.s32.totalorder %v529, 16
      %vm562 = vcmp.lt.s32.totalorder %v530, 16
      %vm563 = vcmp.lt.s32.totalorder %v531, 16
      %vm564 = vcmp.lt.s32.totalorder %v532, 16
      %vm565 = vcmp.lt.s32.totalorder %v533, 16
      %vm566 = vmand %vm534, %vm550
      %vm567 = vmand %vm535, %vm551
      %vm568 = vmand %vm536, %vm552
      %vm569 = vmand %vm537, %vm553
      %vm570 = vmand %vm538, %vm554
      %vm571 = vmand %vm539, %vm555
      %vm572 = vmand %vm540, %vm556
      %vm573 = vmand %vm541, %vm557
      %vm574 = vmand %vm542, %vm558
      %vm575 = vmand %vm543, %vm559
      %vm576 = vmand %vm544, %vm560
      %vm577 = vmand %vm545, %vm561
      %vm578 = vmand %vm546, %vm562
      %vm579 = vmand %vm547, %vm563
      %vm580 = vmand %vm548, %vm564
      %vm581 = vmand %vm549, %vm565
      %v582 = vld [vmem:[%s3] sm:$0x1]
      %v584 = vlaneseq
      %v585 = vshrl.u32 %v584, 7
      %v586 = vsub.s32 0, %v585
      %v587 = vrot.slane %v582, %v586
      %v589 = vrot.slane %v229, 7
      %v590 = vrot.slane %v230, 7
      %v591 = vrot.slane %v231, 7
      %v592 = vrot.slane %v232, 7
      %v593 = vrot.slane %v233, 7
      %v594 = vrot.slane %v234, 7
      %v595 = vrot.slane %v235, 7
      %v596 = vrot.slane %v236, 7
      %v597 = vrot.slane %v237, 7
      %v598 = vrot.slane %v238, 7
      %v599 = vrot.slane %v239, 7
      %v600 = vrot.slane %v240, 7
      %v601 = vrot.slane %v241, 7
      %v602 = vrot.slane %v242, 7
      %v603 = vrot.slane %v243, 7
      %v604 = vrot.slane %v244, 7
      %vm605 = vcmp.lt.s32.totalorder %v246, 1
      %v606 = vsel %vm605, %v603, %v604
      %v607 = vsel %vm605, %v602, %v603
      %v608 = vsel %vm605, %v601, %v602
      %v609 = vsel %vm605, %v600, %v601
      %v610 = vsel %vm605, %v599, %v600
      %v611 = vsel %vm605, %v598, %v599
      %v612 = vsel %vm605, %v597, %v598
      %v613 = vsel %vm605, %v596, %v597
      %v614 = vsel %vm605, %v595, %v596
      %v615 = vsel %vm605, %v594, %v595
      %v616 = vsel %vm605, %v593, %v594
      %v617 = vsel %vm605, %v592, %v593
      %v618 = vsel %vm605, %v591, %v592
      %v619 = vsel %vm605, %v590, %v591
      %v620 = vsel %vm605, %v589, %v590
      %v621 = vsel %vm605, %v604, %v589
      %v622 = vsel %vm502, %v621, 0.0
      %v623 = vsel %vm503, %v620, 0.0
      %v624 = vsel %vm504, %v619, 0.0
      %v625 = vsel %vm505, %v618, 0.0
      %v626 = vsel %vm506, %v617, 0.0
      %v627 = vsel %vm507, %v616, 0.0
      %v628 = vsel %vm508, %v615, 0.0
      %v629 = vsel %vm509, %v614, 0.0
      %v630 = vsel %vm510, %v613, 0.0
      %v631 = vsel %vm511, %v612, 0.0
      %v632 = vsel %vm512, %v611, 0.0
      %v633 = vsel %vm513, %v610, 0.0
      %v634 = vsel %vm514, %v609, 0.0
      %v635 = vsel %vm515, %v608, 0.0
      %v636 = vsel %vm516, %v607, 0.0
      %v637 = vsel %vm517, %v606, 0.0
      %638 = vrot.lane.b32.xlu0 %v622, 8
      %v639 = vpop.permute.xlu0 %638
      %640 = vrot.lane.b32.xlu0 %v623, 8
      %v641 = vpop.permute.xlu0 %640
      %642 = vrot.lane.b32.xlu0 %v624, 8
      %v643 = vpop.permute.xlu0 %642
      %644 = vrot.lane.b32.xlu0 %v625, 8
      %v645 = vpop.permute.xlu0 %644
      %646 = vrot.lane.b32.xlu0 %v626, 8
      %v647 = vpop.permute.xlu0 %646
      %648 = vrot.lane.b32.xlu0 %v627, 8
      %v649 = vpop.permute.xlu0 %648
      %650 = vrot.lane.b32.xlu0 %v628, 8
      %v651 = vpop.permute.xlu0 %650
      %652 = vrot.lane.b32.xlu0 %v629, 8
      %v653 = vpop.permute.xlu0 %652
      %654 = vrot.lane.b32.xlu0 %v630, 8
      %v655 = vpop.permute.xlu0 %654
      %656 = vrot.lane.b32.xlu0 %v631, 8
      %v657 = vpop.permute.xlu0 %656
      %658 = vrot.lane.b32.xlu0 %v632, 8
      %v659 = vpop.permute.xlu0 %658
      %660 = vrot.lane.b32.xlu0 %v633, 8
      %v661 = vpop.permute.xlu0 %660
      %662 = vrot.lane.b32.xlu0 %v634, 8
      %v663 = vpop.permute.xlu0 %662
      %664 = vrot.lane.b32.xlu0 %v635, 8
      %v665 = vpop.permute.xlu0 %664
      %666 = vrot.lane.b32.xlu0 %v636, 8
      %v667 = vpop.permute.xlu0 %666
      %668 = vrot.lane.b32.xlu0 %v637, 8
      %v669 = vpop.permute.xlu0 %668
      %v670 = vld [vmem:[%s1] sm:$0x1]
      %v671 = vlaneseq
      %v672 = vshrl.u32 %v671, 7
      %v673 = vsub.s32 0, %v672
      %v674 = vrot.slane %v670, %v673
      %v675 = vmul.f32 %v639, %v674
      %v676 = vmul.f32 %v641, %v674
      %v677 = vmul.f32 %v643, %v674
      %v678 = vmul.f32 %v645, %v674
      %v679 = vmul.f32 %v647, %v674
      %v680 = vmul.f32 %v649, %v674
      %v681 = vmul.f32 %v651, %v674
      %v682 = vmul.f32 %v653, %v674
      %v683 = vmul.f32 %v655, %v674
      %v684 = vmul.f32 %v657, %v674
      %v685 = vmul.f32 %v659, %v674
      %v686 = vmul.f32 %v661, %v674
      %v687 = vmul.f32 %v663, %v674
      %v688 = vmul.f32 %v665, %v674
      %v689 = vmul.f32 %v667, %v674
      %v690 = vmul.f32 %v669, %v674
      %v691 = vadd.f32 %v587, %v675
      %v692 = vadd.f32 %v587, %v676
      %v693 = vadd.f32 %v587, %v677
      %v694 = vadd.f32 %v587, %v678
      %v695 = vadd.f32 %v587, %v679
      %v696 = vadd.f32 %v587, %v680
      %v697 = vadd.f32 %v587, %v681
      %v698 = vadd.f32 %v587, %v682
      %v699 = vadd.f32 %v587, %v683
      %v700 = vadd.f32 %v587, %v684
      %v701 = vadd.f32 %v587, %v685
      %v702 = vadd.f32 %v587, %v686
      %v703 = vadd.f32 %v587, %v687
      %v704 = vadd.f32 %v587, %v688
      %v705 = vadd.f32 %v587, %v689
      %v706 = vadd.f32 %v587, %v690
      %v707 = vld [vmem:[%s1 + $0x1] sm:$0x1]
      %v708 = vlaneseq
      %v709 = vshrl.u32 %v708, 7
      %v710 = vsub.s32 0, %v709
      %v711 = vrot.slane %v707, %v710
      %v712 = vmul.f32 %v622, %v711
      %v713 = vmul.f32 %v623, %v711
      %v714 = vmul.f32 %v624, %v711
      %v715 = vmul.f32 %v625, %v711
      %v716 = vmul.f32 %v626, %v711
      %v717 = vmul.f32 %v627, %v711
      %v718 = vmul.f32 %v628, %v711
      %v719 = vmul.f32 %v629, %v711
      %v720 = vmul.f32 %v630, %v711
      %v721 = vmul.f32 %v631, %v711
      %v722 = vmul.f32 %v632, %v711
      %v723 = vmul.f32 %v633, %v711
      %v724 = vmul.f32 %v634, %v711
      %v725 = vmul.f32 %v635, %v711
      %v726 = vmul.f32 %v636, %v711
      %v727 = vmul.f32 %v637, %v711
      %v728 = vadd.f32 %v691, %v712
      %v729 = vadd.f32 %v692, %v713
      %v730 = vadd.f32 %v693, %v714
      %v731 = vadd.f32 %v694, %v715
      %v732 = vadd.f32 %v695, %v716
      %v733 = vadd.f32 %v696, %v717
      %v734 = vadd.f32 %v697, %v718
      %v735 = vadd.f32 %v698, %v719
      %v736 = vadd.f32 %v699, %v720
      %v737 = vadd.f32 %v700, %v721
      %v738 = vadd.f32 %v701, %v722
      %v739 = vadd.f32 %v702, %v723
      %v740 = vadd.f32 %v703, %v724
      %v741 = vadd.f32 %v704, %v725
      %v742 = vadd.f32 %v705, %v726
      %v743 = vadd.f32 %v706, %v727
      %744 = vrot.lane.b32.xlu0 %v622, 120
      %v745 = vpop.permute.xlu0 %744
      %746 = vrot.lane.b32.xlu0 %v623, 120
      %v747 = vpop.permute.xlu0 %746
      %748 = vrot.lane.b32.xlu0 %v624, 120
      %v749 = vpop.permute.xlu0 %748
      %750 = vrot.lane.b32.xlu0 %v625, 120
      %v751 = vpop.permute.xlu0 %750
      %752 = vrot.lane.b32.xlu0 %v626, 120
      %v753 = vpop.permute.xlu0 %752
      %754 = vrot.lane.b32.xlu0 %v627, 120
      %v755 = vpop.permute.xlu0 %754
      %756 = vrot.lane.b32.xlu0 %v628, 120
      %v757 = vpop.permute.xlu0 %756
      %758 = vrot.lane.b32.xlu0 %v629, 120
      %v759 = vpop.permute.xlu0 %758
      %760 = vrot.lane.b32.xlu0 %v630, 120
      %v761 = vpop.permute.xlu0 %760
      %762 = vrot.lane.b32.xlu0 %v631, 120
      %v763 = vpop.permute.xlu0 %762
      %764 = vrot.lane.b32.xlu0 %v632, 120
      %v765 = vpop.permute.xlu0 %764
      %766 = vrot.lane.b32.xlu0 %v633, 120
      %v767 = vpop.permute.xlu0 %766
      %768 = vrot.lane.b32.xlu0 %v634, 120
      %v769 = vpop.permute.xlu0 %768
      %770 = vrot.lane.b32.xlu0 %v635, 120
      %v771 = vpop.permute.xlu0 %770
      %772 = vrot.lane.b32.xlu0 %v636, 120
      %v773 = vpop.permute.xlu0 %772
      %774 = vrot.lane.b32.xlu0 %v637, 120
      %v775 = vpop.permute.xlu0 %774
      %v776 = vld [vmem:[%s1 + $0x2] sm:$0x1]
      %v777 = vlaneseq
      %v778 = vshrl.u32 %v777, 7
      %v779 = vsub.s32 0, %v778
      %v780 = vrot.slane %v776, %v779
      %v781 = vmul.f32 %v745, %v780
      %v782 = vmul.f32 %v747, %v780
      %v783 = vmul.f32 %v749, %v780
      %v784 = vmul.f32 %v751, %v780
      %v785 = vmul.f32 %v753, %v780
      %v786 = vmul.f32 %v755, %v780
      %v787 = vmul.f32 %v757, %v780
      %v788 = vmul.f32 %v759, %v780
      %v789 = vmul.f32 %v761, %v780
      %v790 = vmul.f32 %v763, %v780
      %v791 = vmul.f32 %v765, %v780
      %v792 = vmul.f32 %v767, %v780
      %v793 = vmul.f32 %v769, %v780
      %v794 = vmul.f32 %v771, %v780
      %v795 = vmul.f32 %v773, %v780
      %v796 = vmul.f32 %v775, %v780
      %v797 = vadd.f32 %v728, %v781
      %v798 = vadd.f32 %v729, %v782
      %v799 = vadd.f32 %v730, %v783
      %v800 = vadd.f32 %v731, %v784
      %v801 = vadd.f32 %v732, %v785
      %v802 = vadd.f32 %v733, %v786
      %v803 = vadd.f32 %v734, %v787
      %v804 = vadd.f32 %v735, %v788
      %v805 = vadd.f32 %v736, %v789
      %v806 = vadd.f32 %v737, %v790
      %v807 = vadd.f32 %v738, %v791
      %v808 = vadd.f32 %v739, %v792
      %v809 = vadd.f32 %v740, %v793
      %v810 = vadd.f32 %v741, %v794
      %v811 = vadd.f32 %v742, %v795
      %v812 = vadd.f32 %v743, %v796
      %813 = vrot.lane.b32.xlu0 %v229, 8
      %v814 = vpop.permute.xlu0 %813
      %815 = vrot.lane.b32.xlu0 %v230, 8
      %v816 = vpop.permute.xlu0 %815
      %817 = vrot.lane.b32.xlu0 %v231, 8
      %v818 = vpop.permute.xlu0 %817
      %819 = vrot.lane.b32.xlu0 %v232, 8
      %v820 = vpop.permute.xlu0 %819
      %821 = vrot.lane.b32.xlu0 %v233, 8
      %v822 = vpop.permute.xlu0 %821
      %823 = vrot.lane.b32.xlu0 %v234, 8
      %v824 = vpop.permute.xlu0 %823
      %825 = vrot.lane.b32.xlu0 %v235, 8
      %v826 = vpop.permute.xlu0 %825
      %827 = vrot.lane.b32.xlu0 %v236, 8
      %v828 = vpop.permute.xlu0 %827
      %829 = vrot.lane.b32.xlu0 %v237, 8
      %v830 = vpop.permute.xlu0 %829
      %831 = vrot.lane.b32.xlu0 %v238, 8
      %v832 = vpop.permute.xlu0 %831
      %833 = vrot.lane.b32.xlu0 %v239, 8
      %v834 = vpop.permute.xlu0 %833
      %835 = vrot.lane.b32.xlu0 %v240, 8
      %v836 = vpop.permute.xlu0 %835
      %837 = vrot.lane.b32.xlu0 %v241, 8
      %v838 = vpop.permute.xlu0 %837
      %839 = vrot.lane.b32.xlu0 %v242, 8
      %v840 = vpop.permute.xlu0 %839
      %841 = vrot.lane.b32.xlu0 %v243, 8
      %v842 = vpop.permute.xlu0 %841
      %843 = vrot.lane.b32.xlu0 %v244, 8
      %v844 = vpop.permute.xlu0 %843
      %v845 = vld [vmem:[%s1 + $0x3] sm:$0x1]
      %v846 = vlaneseq
      %v847 = vshrl.u32 %v846, 7
      %v848 = vsub.s32 0, %v847
      %v849 = vrot.slane %v845, %v848
      %v850 = vmul.f32 %v814, %v849
      %v851 = vmul.f32 %v816, %v849
      %v852 = vmul.f32 %v818, %v849
      %v853 = vmul.f32 %v820, %v849
      %v854 = vmul.f32 %v822, %v849
      %v855 = vmul.f32 %v824, %v849
      %v856 = vmul.f32 %v826, %v849
      %v857 = vmul.f32 %v828, %v849
      %v858 = vmul.f32 %v830, %v849
      %v859 = vmul.f32 %v832, %v849
      %v860 = vmul.f32 %v834, %v849
      %v861 = vmul.f32 %v836, %v849
      %v862 = vmul.f32 %v838, %v849
      %v863 = vmul.f32 %v840, %v849
      %v864 = vmul.f32 %v842, %v849
      %v865 = vmul.f32 %v844, %v849
      %v866 = vadd.f32 %v797, %v850
      %v867 = vadd.f32 %v798, %v851
      %v868 = vadd.f32 %v799, %v852
      %v869 = vadd.f32 %v800, %v853
      %v870 = vadd.f32 %v801, %v854
      %v871 = vadd.f32 %v802, %v855
      %v872 = vadd.f32 %v803, %v856
      %v873 = vadd.f32 %v804, %v857
      %v874 = vadd.f32 %v805, %v858
      %v875 = vadd.f32 %v806, %v859
      %v876 = vadd.f32 %v807, %v860
      %v877 = vadd.f32 %v808, %v861
      %v878 = vadd.f32 %v809, %v862
      %v879 = vadd.f32 %v810, %v863
      %v880 = vadd.f32 %v811, %v864
      %v881 = vadd.f32 %v812, %v865
      %v882 = vld [vmem:[%s1 + $0x4] sm:$0x1]
      %v883 = vlaneseq
      %v884 = vshrl.u32 %v883, 7
      %v885 = vsub.s32 0, %v884
      %v886 = vrot.slane %v882, %v885
      %v887 = vmul.f32 %v229, %v886
      %v888 = vmul.f32 %v230, %v886
      %v889 = vmul.f32 %v231, %v886
      %v890 = vmul.f32 %v232, %v886
      %v891 = vmul.f32 %v233, %v886
      %v892 = vmul.f32 %v234, %v886
      %v893 = vmul.f32 %v235, %v886
      %v894 = vmul.f32 %v236, %v886
      %v895 = vmul.f32 %v237, %v886
      %v896 = vmul.f32 %v238, %v886
      %v897 = vmul.f32 %v239, %v886
      %v898 = vmul.f32 %v240, %v886
      %v899 = vmul.f32 %v241, %v886
      %v900 = vmul.f32 %v242, %v886
      %v901 = vmul.f32 %v243, %v886
      %v902 = vmul.f32 %v244, %v886
      %v903 = vadd.f32 %v866, %v887
      %v904 = vadd.f32 %v867, %v888
      %v905 = vadd.f32 %v868, %v889
      %v906 = vadd.f32 %v869, %v890
      %v907 = vadd.f32 %v870, %v891
      %v908 = vadd.f32 %v871, %v892
      %v909 = vadd.f32 %v872, %v893
      %v910 = vadd.f32 %v873, %v894
      %v911 = vadd.f32 %v874, %v895
      %v912 = vadd.f32 %v875, %v896
      %v913 = vadd.f32 %v876, %v897
      %v914 = vadd.f32 %v877, %v898
      %v915 = vadd.f32 %v878, %v899
      %v916 = vadd.f32 %v879, %v900
      %v917 = vadd.f32 %v880, %v901
      %v918 = vadd.f32 %v881, %v902
      %919 = vrot.lane.b32.xlu0 %v229, 120
      %v920 = vpop.permute.xlu0 %919
      %921 = vrot.lane.b32.xlu0 %v230, 120
      %v922 = vpop.permute.xlu0 %921
      %923 = vrot.lane.b32.xlu0 %v231, 120
      %v924 = vpop.permute.xlu0 %923
      %925 = vrot.lane.b32.xlu0 %v232, 120
      %v926 = vpop.permute.xlu0 %925
      %927 = vrot.lane.b32.xlu0 %v233, 120
      %v928 = vpop.permute.xlu0 %927
      %929 = vrot.lane.b32.xlu0 %v234, 120
      %v930 = vpop.permute.xlu0 %929
      %931 = vrot.lane.b32.xlu0 %v235, 120
      %v932 = vpop.permute.xlu0 %931
      %933 = vrot.lane.b32.xlu0 %v236, 120
      %v934 = vpop.permute.xlu0 %933
      %935 = vrot.lane.b32.xlu0 %v237, 120
      %v936 = vpop.permute.xlu0 %935
      %937 = vrot.lane.b32.xlu0 %v238, 120
      %v938 = vpop.permute.xlu0 %937
      %939 = vrot.lane.b32.xlu0 %v239, 120
      %v940 = vpop.permute.xlu0 %939
      %941 = vrot.lane.b32.xlu0 %v240, 120
      %v942 = vpop.permute.xlu0 %941
      %943 = vrot.lane.b32.xlu0 %v241, 120
      %v944 = vpop.permute.xlu0 %943
      %945 = vrot.lane.b32.xlu0 %v242, 120
      %v946 = vpop.permute.xlu0 %945
      %947 = vrot.lane.b32.xlu0 %v243, 120
      %v948 = vpop.permute.xlu0 %947
      %949 = vrot.lane.b32.xlu0 %v244, 120
      %v950 = vpop.permute.xlu0 %949
      %v951 = vld [vmem:[%s1 + $0x5] sm:$0x1]
      %v952 = vlaneseq
      %v953 = vshrl.u32 %v952, 7
      %v954 = vsub.s32 0, %v953
      %v955 = vrot.slane %v951, %v954
      %v956 = vmul.f32 %v920, %v955
      %v957 = vmul.f32 %v922, %v955
      %v958 = vmul.f32 %v924, %v955
      %v959 = vmul.f32 %v926, %v955
      %v960 = vmul.f32 %v928, %v955
      %v961 = vmul.f32 %v930, %v955
      %v962 = vmul.f32 %v932, %v955
      %v963 = vmul.f32 %v934, %v955
      %v964 = vmul.f32 %v936, %v955
      %v965 = vmul.f32 %v938, %v955
      %v966 = vmul.f32 %v940, %v955
      %v967 = vmul.f32 %v942, %v955
      %v968 = vmul.f32 %v944, %v955
      %v969 = vmul.f32 %v946, %v955
      %v970 = vmul.f32 %v948, %v955
      %v971 = vmul.f32 %v950, %v955
      %v972 = vadd.f32 %v903, %v956
      %v973 = vadd.f32 %v904, %v957
      %v974 = vadd.f32 %v905, %v958
      %v975 = vadd.f32 %v906, %v959
      %v976 = vadd.f32 %v907, %v960
      %v977 = vadd.f32 %v908, %v961
      %v978 = vadd.f32 %v909, %v962
      %v979 = vadd.f32 %v910, %v963
      %v980 = vadd.f32 %v911, %v964
      %v981 = vadd.f32 %v912, %v965
      %v982 = vadd.f32 %v913, %v966
      %v983 = vadd.f32 %v914, %v967
      %v984 = vadd.f32 %v915, %v968
      %v985 = vadd.f32 %v916, %v969
      %v986 = vadd.f32 %v917, %v970
      %v987 = vadd.f32 %v918, %v971
      %v988 = vrot.slane %v229, 1
      %v989 = vrot.slane %v230, 1
      %v990 = vrot.slane %v231, 1
      %v991 = vrot.slane %v232, 1
      %v992 = vrot.slane %v233, 1
      %v993 = vrot.slane %v234, 1
      %v994 = vrot.slane %v235, 1
      %v995 = vrot.slane %v236, 1
      %v996 = vrot.slane %v237, 1
      %v997 = vrot.slane %v238, 1
      %v998 = vrot.slane %v239, 1
      %v999 = vrot.slane %v240, 1
      %v1000 = vrot.slane %v241, 1
      %v1001 = vrot.slane %v242, 1
      %v1002 = vrot.slane %v243, 1
      %v1003 = vrot.slane %v244, 1
      %vm1004 = vcmp.lt.s32.totalorder %v246, 7
      %v1005 = vsel %vm1004, %v1002, %v1003
      %v1006 = vsel %vm1004, %v1001, %v1002
      %v1007 = vsel %vm1004, %v1000, %v1001
      %v1008 = vsel %vm1004, %v999, %v1000
      %v1009 = vsel %vm1004, %v998, %v999
      %v1010 = vsel %vm1004, %v997, %v998
      %v1011 = vsel %vm1004, %v996, %v997
      %v1012 = vsel %vm1004, %v995, %v996
      %v1013 = vsel %vm1004, %v994, %v995
      %v1014 = vsel %vm1004, %v993, %v994
      %v1015 = vsel %vm1004, %v992, %v993
      %v1016 = vsel %vm1004, %v991, %v992
      %v1017 = vsel %vm1004, %v990, %v991
      %v1018 = vsel %vm1004, %v989, %v990
      %v1019 = vsel %vm1004, %v988, %v989
      %v1020 = vsel %vm1004, %v1003, %v988
      %v1021 = vsel %vm566, %v1019, 0.0
      %v1022 = vsel %vm567, %v1018, 0.0
      %v1023 = vsel %vm568, %v1017, 0.0
      %v1024 = vsel %vm569, %v1016, 0.0
      %v1025 = vsel %vm570, %v1015, 0.0
      %v1026 = vsel %vm571, %v1014, 0.0
      %v1027 = vsel %vm572, %v1013, 0.0
      %v1028 = vsel %vm573, %v1012, 0.0
      %v1029 = vsel %vm574, %v1011, 0.0
      %v1030 = vsel %vm575, %v1010, 0.0
      %v1031 = vsel %vm576, %v1009, 0.0
      %v1032 = vsel %vm577, %v1008, 0.0
      %v1033 = vsel %vm578, %v1007, 0.0
      %v1034 = vsel %vm579, %v1006, 0.0
      %v1035 = vsel %vm580, %v1005, 0.0
      %v1036 = vsel %vm581, %v1020, 0.0
      %1037 = vrot.lane.b32.xlu0 %v1021, 8
      %v1038 = vpop.permute.xlu0 %1037
      %1039 = vrot.lane.b32.xlu0 %v1022, 8
      %v1040 = vpop.permute.xlu0 %1039
      %1041 = vrot.lane.b32.xlu0 %v1023, 8
      %v1042 = vpop.permute.xlu0 %1041
      %1043 = vrot.lane.b32.xlu0 %v1024, 8
      %v1044 = vpop.permute.xlu0 %1043
      %1045 = vrot.lane.b32.xlu0 %v1025, 8
      %v1046 = vpop.permute.xlu0 %1045
      %1047 = vrot.lane.b32.xlu0 %v1026, 8
      %v1048 = vpop.permute.xlu0 %1047
      %1049 = vrot.lane.b32.xlu0 %v1027, 8
      %v1050 = vpop.permute.xlu0 %1049
      %1051 = vrot.lane.b32.xlu0 %v1028, 8
      %v1052 = vpop.permute.xlu0 %1051
      %1053 = vrot.lane.b32.xlu0 %v1029, 8
      %v1054 = vpop.permute.xlu0 %1053
      %1055 = vrot.lane.b32.xlu0 %v1030, 8
      %v1056 = vpop.permute.xlu0 %1055
      %1057 = vrot.lane.b32.xlu0 %v1031, 8
      %v1058 = vpop.permute.xlu0 %1057
      %1059 = vrot.lane.b32.xlu0 %v1032, 8
      %v1060 = vpop.permute.xlu0 %1059
      %1061 = vrot.lane.b32.xlu0 %v1033, 8
      %v1062 = vpop.permute.xlu0 %1061
      %1063 = vrot.lane.b32.xlu0 %v1034, 8
      %v1064 = vpop.permute.xlu0 %1063
      %1065 = vrot.lane.b32.xlu0 %v1035, 8
      %v1066 = vpop.permute.xlu0 %1065
      %1067 = vrot.lane.b32.xlu0 %v1036, 8
      %v1068 = vpop.permute.xlu0 %1067
      %v1069 = vld [vmem:[%s1 + $0x6] sm:$0x1]
      %v1070 = vlaneseq
      %v1071 = vshrl.u32 %v1070, 7
      %v1072 = vsub.s32 0, %v1071
      %v1073 = vrot.slane %v1069, %v1072
      %v1074 = vmul.f32 %v1038, %v1073
      %v1075 = vmul.f32 %v1040, %v1073
      %v1076 = vmul.f32 %v1042, %v1073
      %v1077 = vmul.f32 %v1044, %v1073
      %v1078 = vmul.f32 %v1046, %v1073
      %v1079 = vmul.f32 %v1048, %v1073
      %v1080 = vmul.f32 %v1050, %v1073
      %v1081 = vmul.f32 %v1052, %v1073
      %v1082 = vmul.f32 %v1054, %v1073
      %v1083 = vmul.f32 %v1056, %v1073
      %v1084 = vmul.f32 %v1058, %v1073
      %v1085 = vmul.f32 %v1060, %v1073
      %v1086 = vmul.f32 %v1062, %v1073
      %v1087 = vmul.f32 %v1064, %v1073
      %v1088 = vmul.f32 %v1066, %v1073
      %v1089 = vmul.f32 %v1068, %v1073
      %v1090 = vadd.f32 %v972, %v1074
      %v1091 = vadd.f32 %v973, %v1075
      %v1092 = vadd.f32 %v974, %v1076
      %v1093 = vadd.f32 %v975, %v1077
      %v1094 = vadd.f32 %v976, %v1078
      %v1095 = vadd.f32 %v977, %v1079
      %v1096 = vadd.f32 %v978, %v1080
      %v1097 = vadd.f32 %v979, %v1081
      %v1098 = vadd.f32 %v980, %v1082
      %v1099 = vadd.f32 %v981, %v1083
      %v1100 = vadd.f32 %v982, %v1084
      %v1101 = vadd.f32 %v983, %v1085
      %v1102 = vadd.f32 %v984, %v1086
      %v1103 = vadd.f32 %v985, %v1087
      %v1104 = vadd.f32 %v986, %v1088
      %v1105 = vadd.f32 %v987, %v1089
      %v1106 = vld [vmem:[%s1 + $0x7] sm:$0x1]
      %v1107 = vlaneseq
      %v1108 = vshrl.u32 %v1107, 7
      %v1109 = vsub.s32 0, %v1108
      %v1110 = vrot.slane %v1106, %v1109
      %v1111 = vmul.f32 %v1021, %v1110
      %v1112 = vmul.f32 %v1022, %v1110
      %v1113 = vmul.f32 %v1023, %v1110
      %v1114 = vmul.f32 %v1024, %v1110
      %v1115 = vmul.f32 %v1025, %v1110
      %v1116 = vmul.f32 %v1026, %v1110
      %v1117 = vmul.f32 %v1027, %v1110
      %v1118 = vmul.f32 %v1028, %v1110
      %v1119 = vmul.f32 %v1029, %v1110
      %v1120 = vmul.f32 %v1030, %v1110
      %v1121 = vmul.f32 %v1031, %v1110
      %v1122 = vmul.f32 %v1032, %v1110
      %v1123 = vmul.f32 %v1033, %v1110
      %v1124 = vmul.f32 %v1034, %v1110
      %v1125 = vmul.f32 %v1035, %v1110
      %v1126 = vmul.f32 %v1036, %v1110
      %v1127 = vadd.f32 %v1090, %v1111
      %v1128 = vadd.f32 %v1091, %v1112
      %v1129 = vadd.f32 %v1092, %v1113
      %v1130 = vadd.f32 %v1093, %v1114
      %v1131 = vadd.f32 %v1094, %v1115
      %v1132 = vadd.f32 %v1095, %v1116
      %v1133 = vadd.f32 %v1096, %v1117
      %v1134 = vadd.f32 %v1097, %v1118
      %v1135 = vadd.f32 %v1098, %v1119
      %v1136 = vadd.f32 %v1099, %v1120
      %v1137 = vadd.f32 %v1100, %v1121
      %v1138 = vadd.f32 %v1101, %v1122
      %v1139 = vadd.f32 %v1102, %v1123
      %v1140 = vadd.f32 %v1103, %v1124
      %v1141 = vadd.f32 %v1104, %v1125
      %v1142 = vadd.f32 %v1105, %v1126
      %1143 = vrot.lane.b32.xlu0 %v1021, 120
      %v1144 = vpop.permute.xlu0 %1143
      %1145 = vrot.lane.b32.xlu0 %v1022, 120
      %v1146 = vpop.permute.xlu0 %1145
      %1147 = vrot.lane.b32.xlu0 %v1023, 120
      %v1148 = vpop.permute.xlu0 %1147
      %1149 = vrot.lane.b32.xlu0 %v1024, 120
      %v1150 = vpop.permute.xlu0 %1149
      %1151 = vrot.lane.b32.xlu0 %v1025, 120
      %v1152 = vpop.permute.xlu0 %1151
      %1153 = vrot.lane.b32.xlu0 %v1026, 120
      %v1154 = vpop.permute.xlu0 %1153
      %1155 = vrot.lane.b32.xlu0 %v1027, 120
      %v1156 = vpop.permute.xlu0 %1155
      %1157 = vrot.lane.b32.xlu0 %v1028, 120
      %v1158 = vpop.permute.xlu0 %1157
      %1159 = vrot.lane.b32.xlu0 %v1029, 120
      %v1160 = vpop.permute.xlu0 %1159
      %1161 = vrot.lane.b32.xlu0 %v1030, 120
      %v1162 = vpop.permute.xlu0 %1161
      %1163 = vrot.lane.b32.xlu0 %v1031, 120
      %v1164 = vpop.permute.xlu0 %1163
      %1165 = vrot.lane.b32.xlu0 %v1032, 120
      %v1166 = vpop.permute.xlu0 %1165
      %1167 = vrot.lane.b32.xlu0 %v1033, 120
      %v1168 = vpop.permute.xlu0 %1167
      %1169 = vrot.lane.b32.xlu0 %v1034, 120
      %v1170 = vpop.permute.xlu0 %1169
      %1171 = vrot.lane.b32.xlu0 %v1035, 120
      %v1172 = vpop.permute.xlu0 %1171
      %1173 = vrot.lane.b32.xlu0 %v1036, 120
      %v1174 = vpop.permute.xlu0 %1173
      %v1175 = vld [vmem:[%s1 + $0x8] sm:$0x1]
      %v1176 = vlaneseq
      %v1177 = vshrl.u32 %v1176, 7
      %v1178 = vsub.s32 0, %v1177
      %v1179 = vrot.slane %v1175, %v1178
      %v1180 = vmul.f32 %v1144, %v1179
      %v1181 = vmul.f32 %v1146, %v1179
      %v1182 = vmul.f32 %v1148, %v1179
      %v1183 = vmul.f32 %v1150, %v1179
      %v1184 = vmul.f32 %v1152, %v1179
      %v1185 = vmul.f32 %v1154, %v1179
      %v1186 = vmul.f32 %v1156, %v1179
      %v1187 = vmul.f32 %v1158, %v1179
      %v1188 = vmul.f32 %v1160, %v1179
      %v1189 = vmul.f32 %v1162, %v1179
      %v1190 = vmul.f32 %v1164, %v1179
      %v1191 = vmul.f32 %v1166, %v1179
      %v1192 = vmul.f32 %v1168, %v1179
      %v1193 = vmul.f32 %v1170, %v1179
      %v1194 = vmul.f32 %v1172, %v1179
      %v1195 = vmul.f32 %v1174, %v1179
      %v1196 = vadd.f32 %v1127, %v1180
      %v1197 = vadd.f32 %v1128, %v1181
      %v1198 = vadd.f32 %v1129, %v1182
      %v1199 = vadd.f32 %v1130, %v1183
      %v1200 = vadd.f32 %v1131, %v1184
      %v1201 = vadd.f32 %v1132, %v1185
      %v1202 = vadd.f32 %v1133, %v1186
      %v1203 = vadd.f32 %v1134, %v1187
      %v1204 = vadd.f32 %v1135, %v1188
      %v1205 = vadd.f32 %v1136, %v1189
      %v1206 = vadd.f32 %v1137, %v1190
      %v1207 = vadd.f32 %v1138, %v1191
      %v1208 = vadd.f32 %v1139, %v1192
      %v1209 = vadd.f32 %v1140, %v1193
      %v1210 = vadd.f32 %v1141, %v1194
      %v1211 = vadd.f32 %v1142, %v1195
      %v1212 = vmax.f32 %v1196, 0.0
      %v1213 = vmax.f32 %v1197, 0.0
      %v1214 = vmax.f32 %v1198, 0.0
      %v1215 = vmax.f32 %v1199, 0.0
      %v1216 = vmax.f32 %v1200, 0.0
      %v1217 = vmax.f32 %v1201, 0.0
      %v1218 = vmax.f32 %v1202, 0.0
      %v1219 = vmax.f32 %v1203, 0.0
      %v1220 = vmax.f32 %v1204, 0.0
      %v1221 = vmax.f32 %v1205, 0.0
      %v1222 = vmax.f32 %v1206, 0.0
      %v1223 = vmax.f32 %v1207, 0.0
      %v1224 = vmax.f32 %v1208, 0.0
      %v1225 = vmax.f32 %v1209, 0.0
      %v1226 = vmax.f32 %v1210, 0.0
      %v1227 = vmax.f32 %v1211, 0.0
      %v1228 = vpack.c.bf16 %v1213, %v1212
      %v1229 = vpack.c.bf16 %v1215, %v1214
      %v1230 = vpack.c.bf16 %v1217, %v1216
      %v1231 = vpack.c.bf16 %v1219, %v1218
      %v1232 = vpack.c.bf16 %v1221, %v1220
      %v1233 = vpack.c.bf16 %v1223, %v1222
      %v1234 = vpack.c.bf16 %v1225, %v1224
      %v1235 = vpack.c.bf16 %v1227, %v1226
      %v1236 = vld [vmem:[%s2] sm:$0xf]
      %v1237 = vld [vmem:[%s2 + $0x4] sm:$0xf]
      %v1238 = vld [vmem:[%s2 + $0x8] sm:$0xf]
      %v1239 = vld [vmem:[%s2 + $0xc] sm:$0xf]
      %v1240 = vld [vmem:[%s2 + $0x10] sm:$0xf]
      %v1241 = vld [vmem:[%s2 + $0x14] sm:$0xf]
      %v1242 = vld [vmem:[%s2 + $0x18] sm:$0xf]
      %v1243 = vld [vmem:[%s2 + $0x1c] sm:$0xf]
      %v1244 = vld [vmem:[%s2 + $0x20] sm:$0xf]
      %v1245 = vld [vmem:[%s2 + $0x24] sm:$0xf]
      %v1246 = vld [vmem:[%s2 + $0x28] sm:$0xf]
      %v1247 = vld [vmem:[%s2 + $0x2c] sm:$0xf]
      %v1248 = vld [vmem:[%s2 + $0x30] sm:$0xf]
      %v1249 = vld [vmem:[%s2 + $0x34] sm:$0xf]
      %v1250 = vld [vmem:[%s2 + $0x38] sm:$0xf]
      %v1251 = vld [vmem:[%s2 + $0x3c] sm:$0xf]
      %v1252 = vld [vmem:[%s4] sm:$0x1]
      %v1254 = vlaneseq
      %v1255 = vshrl.u32 %v1254, 7
      %v1256 = vsub.s32 0, %v1255
      %v1257 = vrot.slane %v1252, %v1256
      %v1275 = vunpack.c.l.b16 %v1236
      %v1276 = vunpack.c.l.b16 %v1237
      %v1277 = vunpack.c.l.b16 %v1238
      %v1278 = vunpack.c.l.b16 %v1239
      %v1279 = vunpack.c.l.b16 %v1240
      %v1280 = vunpack.c.l.b16 %v1241
      %v1281 = vunpack.c.l.b16 %v1242
      %v1282 = vunpack.c.l.b16 %v1243
      %v1283 = vunpack.c.l.b16 %v1244
      %v1284 = vunpack.c.l.b16 %v1245
      %v1285 = vunpack.c.l.b16 %v1246
      %v1286 = vunpack.c.l.b16 %v1247
      %v1287 = vunpack.c.l.b16 %v1248
      %v1288 = vunpack.c.l.b16 %v1249
      %v1289 = vunpack.c.l.b16 %v1250
      %v1290 = vunpack.c.l.b16 %v1251
      %v1291 = vpack.c.b16 %v1276, %v1275
      %v1292 = vpack.c.b16 %v1278, %v1277
      %v1293 = vpack.c.b16 %v1280, %v1279
      %v1294 = vpack.c.b16 %v1282, %v1281
      %v1295 = vpack.c.b16 %v1284, %v1283
      %v1296 = vpack.c.b16 %v1286, %v1285
      %v1297 = vpack.c.b16 %v1288, %v1287
      %v1298 = vpack.c.b16 %v1290, %v1289
      %1307 = vmatprep.subr.bf16.mxu0 0
      %1308 = vmatpush1.bf16.msra.mxu0 %v1291
      %1309 = vmatprep.subr.bf16.mxu0 0
      %1310 = vmatpush1.bf16.msra.mxu0 %v1292
      %1311 = vmatprep.subr.bf16.mxu0 0
      %1312 = vmatpush1.bf16.msra.mxu0 %v1293
      %1313 = vmatprep.subr.bf16.mxu0 0
      %1314 = vmatpush1.bf16.msra.mxu0 %v1294
      %1315 = vmatprep.subr.bf16.mxu0 0
      %1316 = vmatpush1.bf16.msra.mxu0 %v1295
      %1317 = vmatprep.subr.bf16.mxu0 0
      %1318 = vmatpush1.bf16.msra.mxu0 %v1296
      %1319 = vmatprep.subr.bf16.mxu0 0
      %1320 = vmatpush1.bf16.msra.mxu0 %v1297
      %1321 = vmatprep.subr.bf16.mxu0 0
      %1322 = vmatpush1.bf16.msra.mxu0 %v1298
      %1323 = vmatprep.subr.bf16.mxu0 0
      %1324 = vmatpush1.bf16.msra.mxu0 0
      %1325 = vmatprep.subr.bf16.mxu0 0
      %1326 = vmatpush1.bf16.msra.mxu0 0
      %1327 = vmatprep.subr.bf16.mxu0 0
      %1328 = vmatpush1.bf16.msra.mxu0 0
      %1329 = vmatprep.subr.bf16.mxu0 0
      %1330 = vmatpush1.bf16.msra.mxu0 0
      %1331 = vmatprep.subr.bf16.mxu0 0
      %1332 = vmatpush1.bf16.msra.mxu0 0
      %1333 = vmatprep.subr.bf16.mxu0 0
      %1334 = vmatpush1.bf16.msra.mxu0 0
      %1335 = vmatprep.subr.bf16.mxu0 0
      %1336 = vmatpush1.bf16.msra.mxu0 0
      %1337 = vmatprep.subr.bf16.mxu0 0
      %1338 = vmatpush1.bf16.msra.mxu0 0
      %1339 = vmatprep.mubr.bf16.mxu0 0
      %1340 = vmatmul.mubr.bf16.gmra.mrb[0].mxu0 %v1228
      %v1341 = vpop.f32.mrb[0].mxu0
      %v1342 = vadd.f32 %v1257, %v1341
      %v1343 = vpop.f32.mrb[0].mxu0
      %v1344 = vpop.f32.mrb[0].mxu0
      %v1345 = vadd.f32 %v1257, %v1344
      %v1346 = vpop.f32.mrb[0].mxu0
      %1347 = vmatprep.mubr.bf16.mxu0 0
      %1348 = vmatmul.mubr.bf16.gmra.mrb[0].mxu0 %v1229
      %v1349 = vpop.f32.mrb[0].mxu0
      %v1350 = vadd.f32 %v1257, %v1349
      %v1351 = vpop.f32.mrb[0].mxu0
      %v1352 = vpop.f32.mrb[0].mxu0
      %v1353 = vadd.f32 %v1257, %v1352
      %v1354 = vpop.f32.mrb[0].mxu0
      %1355 = vmatprep.mubr.bf16.mxu0 0
      %1356 = vmatmul.mubr.bf16.gmra.mrb[0].mxu0 %v1230
      %v1357 = vpop.f32.mrb[0].mxu0
      %v1358 = vadd.f32 %v1257, %v1357
      %v1359 = vpop.f32.mrb[0].mxu0
      %v1360 = vpop.f32.mrb[0].mxu0
      %v1361 = vadd.f32 %v1257, %v1360
      %v1362 = vpop.f32.mrb[0].mxu0
      %1363 = vmatprep.mubr.bf16.mxu0 0
      %1364 = vmatmul.mubr.bf16.gmra.mrb[0].mxu0 %v1231
      %v1365 = vpop.f32.mrb[0].mxu0
      %v1366 = vadd.f32 %v1257, %v1365
      %v1367 = vpop.f32.mrb[0].mxu0
      %v1368 = vpop.f32.mrb[0].mxu0
      %v1369 = vadd.f32 %v1257, %v1368
      %v1370 = vpop.f32.mrb[0].mxu0
      %1371 = vmatprep.mubr.bf16.mxu0 0
      %1372 = vmatmul.mubr.bf16.gmra.mrb[0].mxu0 %v1232
      %v1373 = vpop.f32.mrb[0].mxu0
      %v1374 = vadd.f32 %v1257, %v1373
      %v1375 = vpop.f32.mrb[0].mxu0
      %v1376 = vpop.f32.mrb[0].mxu0
      %v1377 = vadd.f32 %v1257, %v1376
      %v1378 = vpop.f32.mrb[0].mxu0
      %1379 = vmatprep.mubr.bf16.mxu0 0
      %1380 = vmatmul.mubr.bf16.gmra.mrb[0].mxu0 %v1233
      %v1381 = vpop.f32.mrb[0].mxu0
      %v1382 = vadd.f32 %v1257, %v1381
      %v1383 = vpop.f32.mrb[0].mxu0
      %v1384 = vpop.f32.mrb[0].mxu0
      %v1385 = vadd.f32 %v1257, %v1384
      %v1386 = vpop.f32.mrb[0].mxu0
      %1387 = vmatprep.mubr.bf16.mxu0 0
      %1388 = vmatmul.mubr.bf16.gmra.mrb[0].mxu0 %v1234
      %v1389 = vpop.f32.mrb[0].mxu0
      %v1390 = vadd.f32 %v1257, %v1389
      %v1391 = vpop.f32.mrb[0].mxu0
      %v1392 = vpop.f32.mrb[0].mxu0
      %v1393 = vadd.f32 %v1257, %v1392
      %v1394 = vpop.f32.mrb[0].mxu0
      %1395 = vmatprep.mubr.bf16.mxu0 0
      %1396 = vmatmul.mubr.bf16.gmra.mrb[0].mxu0 %v1235
      %v1397 = vpop.f32.mrb[0].mxu0
      %v1398 = vadd.f32 %v1257, %v1397
      %v1399 = vpop.f32.mrb[0].mxu0
      %v1400 = vpop.f32.mrb[0].mxu0
      %v1401 = vadd.f32 %v1257, %v1400
      %v1402 = vpop.f32.mrb[0].mxu0
      %1403 = vdwg.mxu0
      %v1404 = vadd.f32 %v229, %v1342
      %v1405 = vadd.f32 %v230, %v1345
      %v1406 = vadd.f32 %v231, %v1350
      %v1407 = vadd.f32 %v232, %v1353
      %v1408 = vadd.f32 %v233, %v1358
      %v1409 = vadd.f32 %v234, %v1361
      %v1410 = vadd.f32 %v235, %v1366
      %v1411 = vadd.f32 %v236, %v1369
      %v1412 = vadd.f32 %v237, %v1374
      %v1413 = vadd.f32 %v238, %v1377
      %v1414 = vadd.f32 %v239, %v1382
      %v1415 = vadd.f32 %v240, %v1385
      %v1416 = vadd.f32 %v241, %v1390
      %v1417 = vadd.f32 %v242, %v1393
      %v1418 = vadd.f32 %v243, %v1398
      %v1419 = vadd.f32 %v244, %v1401
      %1420 = vst [vmem:[%s226] sm:$0xff] %v1404
      %1421 = vst [vmem:[%s226 + $0x8] sm:$0xff] %v1405
      %1422 = vst [vmem:[%s226 + $0x10] sm:$0xff] %v1406
      %1423 = vst [vmem:[%s226 + $0x18] sm:$0xff] %v1407
      %1424 = vst [vmem:[%s226 + $0x20] sm:$0xff] %v1408
      %1425 = vst [vmem:[%s226 + $0x28] sm:$0xff] %v1409
      %1426 = vst [vmem:[%s226 + $0x30] sm:$0xff] %v1410
      %1427 = vst [vmem:[%s226 + $0x38] sm:$0xff] %v1411
      %1428 = vst [vmem:[%s226 + $0x40] sm:$0xff] %v1412
      %1429 = vst [vmem:[%s226 + $0x48] sm:$0xff] %v1413
      %1430 = vst [vmem:[%s226 + $0x50] sm:$0xff] %v1414
      %1431 = vst [vmem:[%s226 + $0x58] sm:$0xff] %v1415
      %1432 = vst [vmem:[%s226 + $0x60] sm:$0xff] %v1416
      %1433 = vst [vmem:[%s226 + $0x68] sm:$0xff] %v1417
      %1434 = vst [vmem:[%s226 + $0x70] sm:$0xff] %v1418
      %1435 = vst [vmem:[%s226 + $0x78] sm:$0xff] %v1419
      %s1436 = smul.u32 16, %s16
      %p1437 = scmp.lt.s32.totalorder %s1436, 31
      %s1438 = scalar_select %p1437, %s1436, 31
      %s1439 = smul.addr %s1438, 8
      %s1440 = scalar_lea.vmem %s5, %s1439
      // Predicated region
      $region41: #{depthwise_separable_block.1} parent=39 // pred_check
        %p1441 = pneg %p144
      $region42: #{depthwise_separable_block.1} parent=39 // pred_check_branch
        %1443 = sbr.rel (%p1441) target = $region44
      $region43: #{depthwise_separable_block.1} parent=39 // pred_region
        %s1444 = smul.u32 16, %s16
      $region44: #{depthwise_separable_block.1} parent=39 // pred_fallthru
        _
    $region40: #{depthwise_separable_block.1} parent=5 // pred_fallthru
      _
    %p1445 = scmp.le.s32.totalorder 2, %s11
    // Predicated region
    $region45: #{depthwise_separable_block.1} parent=5 // pred_check
      %p1446 = pneg %p1445
    $region46: #{depthwise_separable_block.1} parent=5 // pred_check_branch
      %1448 = sbr.rel (%p1446) target = $region48
    $region47: #{depthwise_separable_block.1} parent=5 // pred_region
      %s1449 = ssub.s32 %s11, 2
      // Predicated region
      $region49: #{depthwise_separable_block.1} parent=47 // pred_check
        %p1450 = pneg %p150
      $region50: #{depthwise_separable_block.1} parent=47 // pred_check_branch
        %1452 = sbr.rel (%p1450) target = $region52
      $region51: #{depthwise_separable_block.1} parent=47 // pred_region
        %s1453 = smul.u32 16, %s17
        %p1454 = scmp.lt.s32.totalorder %s1453, 31
        %s1455 = scalar_select %p1454, %s1453, 31
        %s1456 = smul.addr %s1455, 8
        %s1457 = scalar_lea.vmem %s5, %s1456
      $region52: #{depthwise_separable_block.1} parent=47 // pred_fallthru
        _
    $region48: #{depthwise_separable_block.1} parent=5 // pred_fallthru
      _
  $region6: #{depthwise_separable_block.1} parent=0 // loop_footer
    %s15 = sadd.s32 1, %s11
  $region7: #{depthwise_separable_block.1} parent=0 // loop_footer_branch
    %10 = sbr.rel target = $region3
  $region8: #{depthwise_separable_block.1} parent=0 // loop_exit
    _

</llo_original>
